<compile_context>
chip_gen: v5e
topology: v5e:2x2
jax: 0.10.0
libtpu: 0.0.40
codegen_flags: <defaults>
</compile_context>

<pallas_src>
import functools
import numpy as np
import jax
import jax.numpy as jnp
from jax.experimental import pallas as pl
from jax.experimental.pallas import tpu as pltpu


def _round_up(x, m):
    return ((x + m - 1) // m) * m


@functools.lru_cache(maxsize=None)
def _vmem_limit_bytes():
    # 64 MiB scoped limit on 128-MiB-VMEM parts (v5e/v6e), 32 MiB on v7x.
    try:
        cap = int(pltpu.get_tpu_info().vmem_capacity_bytes)
        return int(min(max(cap // 2, 32 * 1024 * 1024), 64 * 1024 * 1024))
    except Exception:
        return 32 * 1024 * 1024


def _vmem_buffer_budget():
    return max(_vmem_limit_bytes() // 2, 4 * 1024 * 1024)


# -----------------------------------------------------------------------------
# Kernel: fused two-head conv3x3 (pad=1, bias), im2col done in-kernel
# -----------------------------------------------------------------------------
def _make_conv_kernel(P, offs):
    def kernel(x_ref, w_ref, b_ref, o_ref):
        # x: [1, Np, C] bf16 (flattened padded NHWC image)
        # w: [9, C, 128] bf16   b: [1, 128] f32   o: [1, P, 128] bf16
        acc = jnp.zeros((P, 128), jnp.float32)
        for idx, off in enumerate(offs):
            xs = x_ref[0, off:off + P, :]                       # contiguous tap slice
            acc = acc + jnp.dot(xs, w_ref[idx],
                                preferred_element_type=jnp.float32)
        o_ref[0] = (acc + b_ref[...]).astype(o_ref.dtype)
    return kernel


def conv3x3_two_heads_pallas(x0, x1, w1, b1, w2, b2):
    """head_1(x0), head_2(x1): conv3x3(C->1, pad=1, bias) fused into one kernel.
    x0, x1: [B, C, H, W].  Returns (h1, h2) as [B, H, W] bf16."""
    B, C, H, W = x0.shape
    Wp = W + 2
    P = H * Wp                         # computed rows per image (incl. pad-col junk)
    Np = (H + 3) * Wp                  # padded rows: 1 top + H + 2 bottom

    # NHWC, zero-pad spatially, flatten (row, col) -> one axis, cast to bf16.
    x = jnp.concatenate([x0, x1], axis=0)                      # [2B, C, H, W]
    x = jnp.transpose(x, (0, 2, 3, 1))                         # [2B, H, W, C]
    xp = jnp.pad(x, ((0, 0), (1, 2), (1, 1), (0, 0)))          # [2B, H+3, W+2, C]
    xp = xp.reshape(2 * B, Np, C).astype(jnp.bfloat16)

    # Weight taps packed [9, C, 128]: lane 0 = head_1, lane 1 = head_2.
    w1p = jnp.transpose(w1[0], (1, 2, 0)).reshape(9, C)        # (kh, kw) major, C minor
    w2p = jnp.transpose(w2[0], (1, 2, 0)).reshape(9, C)
    wc = jnp.zeros((9, C, 128), jnp.float32)
    wc = wc.at[:, :, 0].set(w1p).at[:, :, 1].set(w2p).astype(jnp.bfloat16)
    bc = jnp.zeros((1, 128), jnp.float32).at[0, 0].set(b1[0]).at[0, 1].set(b2[0])

    # Tap (kh, kw) is a contiguous slice starting at kh*(W+2)+kw in the flat slab.
    offs = tuple(kh * Wp + kw for kh in range(3) for kw in range(3))

    out = pl.pallas_call(
        _make_conv_kernel(P, offs),
        out_shape=jax.ShapeDtypeStruct((2 * B, P, 128), jnp.bfloat16),
        grid=(2 * B,),
        in_specs=[
            pl.BlockSpec((1, Np, C), lambda b: (b, 0, 0)),     # one image per step
            pl.BlockSpec((9, C, 128), lambda b: (0, 0, 0)),    # weights resident
            pl.BlockSpec((1, 128), lambda b: (0, 0)),          # bias resident
        ],
        out_specs=pl.BlockSpec((1, P, 128), lambda b: (b, 0, 0)),
        compiler_params=pltpu.CompilerParams(
            dimension_semantics=("parallel",),
            vmem_limit_bytes=_vmem_limit_bytes()),
    )(xp, wc, bc)

    # Drop the pad-column junk rows and pick each head's lane.
    out = out.reshape(2, B, H, Wp, 128)
    h1 = out[0, :, :, :W, 0]
    h2 = out[1, :, :, :W, 1]
    return h1, h2


# -----------------------------------------------------------------------------
# Kernel: separable bilinear resize (align_corners=True) + optional sigmoid
# -----------------------------------------------------------------------------
def _make_resize_kernel(apply_sigmoid, nb):
    def kernel(x_ref, l_ref, rt_ref, o_ref):
        # x: [NB, Hin, Win]   l: [Hout, Hin] f32   rt: [Win, Woutp] f32
        L = l_ref[...]
        RT = rt_ref[...]
        for n in range(nb):
            xn = x_ref[n].astype(jnp.float32)
            # width pass first -> lane-dense [Hin, Woutp] intermediate
            t = jnp.dot(xn, RT, preferred_element_type=jnp.float32)
            y = jnp.dot(L, t, preferred_element_type=jnp.float32)
            if apply_sigmoid:
                y = jax.nn.sigmoid(y)
            o_ref[n] = y.astype(o_ref.dtype)                   # stored immediately
    return kernel


def _interp_matrix(out_size, in_size):
    """Interpolation matrix for bilinear resize with align_corners=True."""
    if in_size == 1:
        return np.ones((out_size, 1), np.float32)
    if out_size == 1:
        src = np.zeros((1,), np.float64)
    else:
        src = np.arange(out_size, dtype=np.float64) * (in_size - 1) / (out_size - 1)
    i0 = np.clip(np.floor(src).astype(np.int64), 0, in_size - 2)
    frac = src - i0
    M = np.zeros((out_size, in_size), np.float32)
    M[np.arange(out_size), i0] = (1.0 - frac).astype(np.float32)
    M[np.arange(out_size), i0 + 1] = frac.astype(np.float32)
    return M


def bilinear_resize_pallas(x, out_h, out_w, apply_sigmoid=False):
    """x: [N, Hin, Win] -> [N, out_h, out_w] bf16; align_corners=True (+sigmoid)."""
    N, Hin, Win = x.shape
    woutp = _round_up(out_w, 128)                       # lane-dense writeback

    in_b = Hin * Win * x.dtype.itemsize
    out_b = out_h * woutp * 2                           # bf16 output
    NB = int(max(1, min(64, _vmem_buffer_budget() // max(2 * (in_b + out_b), 1))))
    NB = min(NB, N)
    N_pad = _round_up(N, NB)
    if N_pad != N:
        x = jnp.pad(x, ((0, N_pad - N), (0, 0), (0, 0)))

    L = jnp.asarray(_interp_matrix(out_h, Hin))         # [out_h, Hin]
    RT = np.zeros((Win, woutp), np.float32)
    RT[:, :out_w] = _interp_matrix(out_w, Win).T
    RT = jnp.asarray(RT)                                # [Win, Woutp]

    out = pl.pallas_call(
        _make_resize_kernel(apply_sigmoid, NB),
        out_shape=jax.ShapeDtypeStruct((N_pad, out_h, woutp), jnp.bfloat16),
        grid=(N_pad // NB,),
        in_specs=[
            pl.BlockSpec((NB, Hin, Win), lambda n: (n, 0, 0)),
            pl.BlockSpec((out_h, Hin), lambda n: (0, 0)),
            pl.BlockSpec((Win, woutp), lambda n: (0, 0)),
        ],
        out_specs=pl.BlockSpec((NB, out_h, woutp), lambda n: (n, 0, 0)),
        compiler_params=pltpu.CompilerParams(
            dimension_semantics=("parallel",),
            vmem_limit_bytes=_vmem_limit_bytes()),
    )(x, L, RT)
    return out[:N, :, :out_w]


# -----------------------------------------------------------------------------
# Kernel: F.soft_margin_loss (mean of stable softplus), streaming reduction
# -----------------------------------------------------------------------------
def _make_soft_margin_kernel(N, TM, nblk_inner):
    def kernel(x_ref, y_ref, o_ref, acc_ref):
        p = pl.program_id(0)
        j = pl.program_id(1)

        @pl.when(j == 0)
        def _():
            acc_ref[0] = jnp.float32(0.0)

        xv = x_ref[...].astype(jnp.float32)
        yv = y_ref[...].astype(jnp.float32)
        z = -yv * xv
        val = jnp.maximum(z, 0.0) + jnp.log1p(jnp.exp(-jnp.abs(z)))   # stable softplus
        row0 = (p * nblk_inner + j) * TM
        rows = jax.lax.broadcasted_iota(jnp.int32, xv.shape, 0) + row0
        acc_ref[0] = acc_ref[0] + jnp.sum(jnp.where(rows < N, val, 0.0))

        @pl.when(j == pl.num_programs(1) - 1)
        def _():
            o_ref[...] = jnp.broadcast_to(acc_ref[0], o_ref.shape)
    return kernel


def soft_margin_loss_pallas(x, y):
    """mean(log(1 + exp(-y*x))).  No operand padding; two partial sums so the
    leading 'parallel' axis can use both TensorCores on v7x."""
    N, D = x.shape
    inv_nd = 1.0 / float(N * D)

    row_bytes = D * (x.dtype.itemsize + y.dtype.itemsize)
    TM = _vmem_buffer_budget() // (2 * max(row_bytes, 1))        # double-buffered
    TM = int(min(TM, 512, _round_up(N, 8)))
    TM = max(8, (TM // 8) * 8)
    nblk = (N + TM - 1) // TM
    nblk_inner = (nblk + 1) // 2

    out = pl.pallas_call(
        _make_soft_margin_kernel(N, TM, nblk_inner),
        out_shape=jax.ShapeDtypeStruct((16, 128), jnp.float32),
        grid=(2, nblk_inner),
        in_specs=[
            pl.BlockSpec((TM, D), lambda p, j: (p * nblk_inner + j, 0)),
            pl.BlockSpec((TM, D), lambda p, j: (p * nblk_inner + j, 0)),
        ],
        out_specs=pl.BlockSpec((8, 128), lambda p, j: (p, 0)),
        scratch_shapes=[pltpu.SMEM((1,), jnp.float32)],
        compiler_params=pltpu.CompilerParams(
            dimension_semantics=("parallel", "arbitrary"),
            vmem_limit_bytes=_vmem_limit_bytes()),
    )(x, y)
    return (out[0, 0] + out[8, 0]) * inv_nd


# -----------------------------------------------------------------------------
# Kernel: log_softmax over channels (whole batch in one grid step)
# -----------------------------------------------------------------------------
def _log_softmax_kernel(x_ref, o_ref):
    v = x_ref[...].astype(jnp.float32)                  # [B, C, HW]; C on sublanes
    m = jnp.max(v, axis=1, keepdims=True)
    e = jnp.exp(v - m)
    o_ref[...] = (v - m - jnp.log(jnp.sum(e, axis=1, keepdims=True))).astype(o_ref.dtype)


def log_softmax_pallas(cls):
    """ModelBuilder.log_softmax: NCHW -> NHWC permute + log_softmax over channels."""
    B, C, H, W = cls.shape
    x = cls.reshape(B, C, H * W)
    out = pl.pallas_call(
        _log_softmax_kernel,
        out_shape=jax.ShapeDtypeStruct((B, C, H * W), jnp.float32),
        grid=(1,),
        in_specs=[pl.BlockSpec((B, C, H * W), lambda i: (0, 0, 0))],
        out_specs=pl.BlockSpec((B, C, H * W), lambda i: (0, 0, 0)),
        compiler_params=pltpu.CompilerParams(
            dimension_semantics=("arbitrary",),
            vmem_limit_bytes=_vmem_limit_bytes()),
    )(x)
    return jnp.transpose(out.reshape(B, C, H, W), (0, 2, 3, 1))


# -----------------------------------------------------------------------------
# Glue (unfold / index_select) -- plain JAX / numpy
# -----------------------------------------------------------------------------
def unfold_transposed(mask, ksize, padding, stride):
    """torch.transpose(F.unfold(mask, k, padding, stride), 1, 2)."""
    B, C, H, W = mask.shape
    mp = jnp.pad(mask, ((0, 0), (0, 0), (padding, padding), (padding, padding)))
    oh = (H + 2 * padding - ksize) // stride + 1
    ow = (W + 2 * padding - ksize) // stride + 1
    patches = []
    for i in range(oh):
        for j in range(ow):
            p = mp[:, :, i * stride:i * stride + ksize, j * stride:j * stride + ksize]
            patches.append(p.reshape(B, C * ksize * ksize))
    return jnp.stack(patches, axis=1)                   # [B, L, C*k*k]


def select_mask_logistic_loss(mask, weight, salient_0, salient_1, pred_mask,
                              o_sz, g_sz, s, unfold_pad, unfold_stride):
    w_flat = np.asarray(weight).reshape(-1)
    pos = np.nonzero(w_flat == 1)[0]
    if pos.size == 0:
        zero = jnp.sum(pred_mask) * 0.0
        return zero, zero, zero
    pos_j = jnp.asarray(pos, dtype=jnp.int32)

    def prep(x, small):
        # [B, C, T, T] -> permute -> view(-1, 1, small, small) -> index_select ->
        # bilinear upsample (align_corners=True) to [g_sz, g_sz] -> view(-1, g_sz*g_sz)
        x = jnp.transpose(x, (0, 2, 3, 1)).reshape(-1, 1, small, small)
        x = jnp.take(x, pos_j, axis=0)
        up = bilinear_resize_pallas(x[:, 0], g_sz, g_sz, apply_sigmoid=False)
        return up.reshape(-1, g_sz * g_sz)

    s0 = prep(salient_0, s)
    s1 = prep(salient_1, s)
    pm = prep(pred_mask, o_sz)

    mask_uf = unfold_transposed(mask, g_sz, unfold_pad, unfold_stride).reshape(-1, g_sz * g_sz)
    mask_uf = jnp.take(mask_uf, pos_j, axis=0)

    return (soft_margin_loss_pallas(s0, mask_uf),
            soft_margin_loss_pallas(s1, mask_uf),
            soft_margin_loss_pallas(pm, mask_uf))


def model_builder_forward(params, data, S, o_sz, g_sz, unfold_pad, unfold_stride):
    T = S * S  # interpolation target (analog of 625 = 25*25 in the real model)

    # head_1 / head_2: fused conv3x3(256 -> 1, bias=True) on xf[0], xf[1]
    h1, h2 = conv3x3_two_heads_pallas(
        data['xf0'], data['xf1'],
        params['w1'], params['b1'], params['w2'], params['b2'])   # each [B, S, S]

    # F.interpolate(..., [T, T], bilinear, align_corners=True) + sigmoid
    logits_2 = bilinear_resize_pallas(h1, T, T, apply_sigmoid=True)[:, None]
    logits_3 = bilinear_resize_pallas(h2, T, T, apply_sigmoid=True)[:, None]

    salient_loss2, salient_loss3, mask_loss = select_mask_logistic_loss(
        data['mask_ground_truth'], data['mask_weight'],
        logits_2, logits_3, data['pred_mask'],
        o_sz=o_sz, g_sz=g_sz, s=S,
        unfold_pad=unfold_pad, unfold_stride=unfold_stride)

    cls_log_softmax = log_softmax_pallas(data['cls'])

    # TODO(synk): cfg.TRAIN.CLS_WEIGHT * cls_loss + cfg.TRAIN.LOC_WEIGHT * loc_loss
    #             omitted (select_cross_entropy_loss / select_iou_loss not provided).
    total_loss = (1.0 / 64) * salient_loss2 + (1.0 / 32) * salient_loss3 + 2.0 * mask_loss

    return {
        'total_loss': total_loss,
        'salient_loss2': salient_loss2,
        'salient_loss3': salient_loss3,
        'mask_loss': mask_loss,
        'cls_log_softmax': cls_log_softmax,
    }


# -----------------------------------------------------------------------------
if __name__ == "__main__":
    key = jax.random.PRNGKey(0)
    ks = jax.random.split(key, 10)

    # Small, internally consistent shapes (real model: S=25, o_sz=63, g_sz=127,
    # mask 255x255, unfold pad=32 stride=8, interpolate 625x625).
    B, C, S = 2, 256, 4          # batch, backbone channels, head feature spatial
    o_sz, g_sz = 3, 7            # mask-branch output / ground-truth patch size
    M = 9                        # mask_ground_truth spatial
    UNFOLD_PAD, UNFOLD_STRIDE = 2, 2   # (M + 2*pad - g_sz)/stride + 1 == S

    data = {
        'xf0': jax.random.normal(ks[0], (B, C, S, S), jnp.float32) * 0.1,
        'xf1': jax.random.normal(ks[1], (B, C, S, S), jnp.float32) * 0.1,
        'cls': jax.random.normal(ks[2], (B, 2, S, S), jnp.float32),
        'pred_mask': jax.random.normal(ks[3], (B, o_sz * o_sz, S, S), jnp.float32),
        'mask_ground_truth': jnp.where(
            jax.random.normal(ks[4], (B, 1, M, M)) >= 0, 1.0, -1.0).astype(jnp.float32),
        'mask_weight': (jax.random.uniform(ks[5], (B, S * S)) > 0.5).astype(jnp.float32),
    }

    params = {
        'w1': jax.random.normal(ks[6], (1, C, 3, 3), jnp.float32) / np.sqrt(C * 9),
        'b1': jnp.full((1,), 0.01, jnp.float32),
        'w2': jax.random.normal(ks[7], (1, C, 3, 3), jnp.float32) / np.sqrt(C * 9),
        'b2': jnp.full((1,), -0.01, jnp.float32),
    }

    outputs = model_builder_forward(params, data, S, o_sz, g_sz, UNFOLD_PAD, UNFOLD_STRIDE)
    jax.block_until_ready(outputs)
    print("KERNEL_OK")
</pallas_src>

<mosaic_0001>
module attributes {stable_mosaic.version = 11 : i64} {
  func.func @kernel(%arg0: i32, %arg1: memref<1x42x256xbf16, #tpu.memory_space<vmem>>, %arg2: memref<9x256x128xbf16, #tpu.memory_space<vmem>>, %arg3: memref<1x128xf32, #tpu.memory_space<vmem>>, %arg4: memref<1x24x128xbf16, #tpu.memory_space<vmem>>) attributes {dimension_semantics = [#tpu.dimension_semantics<parallel>], iteration_bounds = array<i64: 4>, scalar_prefetch = 0 : i64, scratch_operands = 0 : i64, tpu.core_type = #tpu.core_type<tc>, window_params = [{transform_indices = @transform_0, window_bounds = array<i64: 1, 42, 256>}, {pipeline_mode = #tpu.pipeline_mode<synchronous>, transform_indices = @transform_1, window_bounds = array<i64: 9, 256, 128>}, {pipeline_mode = #tpu.pipeline_mode<synchronous>, transform_indices = @transform_2, window_bounds = array<i64: 1, 128>}, {transform_indices = @transform_3, window_bounds = array<i64: 1, 24, 128>}]} {
    %cst = arith.constant 0.000000e+00 : f32
    %0 = vector.broadcast %cst : f32 to vector<24x128xf32>
    %c0 = arith.constant 0 : index
    %c0_0 = arith.constant 0 : index
    %c0_1 = arith.constant 0 : index
    %1 = vector.load %arg1[%c0, %c0_0, %c0_1] : memref<1x42x256xbf16, #tpu.memory_space<vmem>>, vector<1x24x256xbf16>
    %2 = vector.shape_cast %1 : vector<1x24x256xbf16> to vector<24x256xbf16>
    %c0_2 = arith.constant 0 : index
    %c0_3 = arith.constant 0 : index
    %c0_4 = arith.constant 0 : index
    %3 = vector.load %arg2[%c0_2, %c0_3, %c0_4] : memref<9x256x128xbf16, #tpu.memory_space<vmem>>, vector<1x256x128xbf16>
    %4 = vector.shape_cast %3 : vector<1x256x128xbf16> to vector<256x128xbf16>
    %cst_5 = arith.constant dense<0.000000e+00> : vector<24x128xf32>
    %5 = tpu.matmul %2, %4, %cst_5 {dimension_numbers = #tpu.dot_dimension_numbers<[1], [0], [0], [1], [0, 0, 1, 1], [], []>} : vector<24x256xbf16>, vector<256x128xbf16>, vector<24x128xf32> -> vector<24x128xf32>
    %6 = arith.addf %0, %5 : vector<24x128xf32>
    %c0_6 = arith.constant 0 : index
    %c1 = arith.constant 1 : index
    %c0_7 = arith.constant 0 : index
    %7 = vector.load %arg1[%c0_6, %c1, %c0_7] : memref<1x42x256xbf16, #tpu.memory_space<vmem>>, vector<1x24x256xbf16>
    %8 = vector.shape_cast %7 : vector<1x24x256xbf16> to vector<24x256xbf16>
    %c1_8 = arith.constant 1 : index
    %c0_9 = arith.constant 0 : index
    %c0_10 = arith.constant 0 : index
    %9 = vector.load %arg2[%c1_8, %c0_9, %c0_10] : memref<9x256x128xbf16, #tpu.memory_space<vmem>>, vector<1x256x128xbf16>
    %10 = vector.shape_cast %9 : vector<1x256x128xbf16> to vector<256x128xbf16>
    %cst_11 = arith.constant dense<0.000000e+00> : vector<24x128xf32>
    %11 = tpu.matmul %8, %10, %cst_11 {dimension_numbers = #tpu.dot_dimension_numbers<[1], [0], [0], [1], [0, 0, 1, 1], [], []>} : vector<24x256xbf16>, vector<256x128xbf16>, vector<24x128xf32> -> vector<24x128xf32>
    %12 = arith.addf %6, %11 : vector<24x128xf32>
    %c0_12 = arith.constant 0 : index
    %c2 = arith.constant 2 : index
    %c0_13 = arith.constant 0 : index
    %13 = vector.load %arg1[%c0_12, %c2, %c0_13] : memref<1x42x256xbf16, #tpu.memory_space<vmem>>, vector<1x24x256xbf16>
    %14 = vector.shape_cast %13 : vector<1x24x256xbf16> to vector<24x256xbf16>
    %c2_14 = arith.constant 2 : index
    %c0_15 = arith.constant 0 : index
    %c0_16 = arith.constant 0 : index
    %15 = vector.load %arg2[%c2_14, %c0_15, %c0_16] : memref<9x256x128xbf16, #tpu.memory_space<vmem>>, vector<1x256x128xbf16>
    %16 = vector.shape_cast %15 : vector<1x256x128xbf16> to vector<256x128xbf16>
    %cst_17 = arith.constant dense<0.000000e+00> : vector<24x128xf32>
    %17 = tpu.matmul %14, %16, %cst_17 {dimension_numbers = #tpu.dot_dimension_numbers<[1], [0], [0], [1], [0, 0, 1, 1], [], []>} : vector<24x256xbf16>, vector<256x128xbf16>, vector<24x128xf32> -> vector<24x128xf32>
    %18 = arith.addf %12, %17 : vector<24x128xf32>
    %c0_18 = arith.constant 0 : index
    %c6 = arith.constant 6 : index
    %c0_19 = arith.constant 0 : index
    %19 = vector.load %arg1[%c0_18, %c6, %c0_19] : memref<1x42x256xbf16, #tpu.memory_space<vmem>>, vector<1x24x256xbf16>
    %20 = vector.shape_cast %19 : vector<1x24x256xbf16> to vector<24x256xbf16>
    %c3 = arith.constant 3 : index
    %c0_20 = arith.constant 0 : index
    %c0_21 = arith.constant 0 : index
    %21 = vector.load %arg2[%c3, %c0_20, %c0_21] : memref<9x256x128xbf16, #tpu.memory_space<vmem>>, vector<1x256x128xbf16>
    %22 = vector.shape_cast %21 : vector<1x256x128xbf16> to vector<256x128xbf16>
    %cst_22 = arith.constant dense<0.000000e+00> : vector<24x128xf32>
    %23 = tpu.matmul %20, %22, %cst_22 {dimension_numbers = #tpu.dot_dimension_numbers<[1], [0], [0], [1], [0, 0, 1, 1], [], []>} : vector<24x256xbf16>, vector<256x128xbf16>, vector<24x128xf32> -> vector<24x128xf32>
    %24 = arith.addf %18, %23 : vector<24x128xf32>
    %c0_23 = arith.constant 0 : index
    %c7 = arith.constant 7 : index
    %c0_24 = arith.constant 0 : index
    %25 = vector.load %arg1[%c0_23, %c7, %c0_24] : memref<1x42x256xbf16, #tpu.memory_space<vmem>>, vector<1x24x256xbf16>
    %26 = vector.shape_cast %25 : vector<1x24x256xbf16> to vector<24x256xbf16>
    %c4 = arith.constant 4 : index
    %c0_25 = arith.constant 0 : index
    %c0_26 = arith.constant 0 : index
    %27 = vector.load %arg2[%c4, %c0_25, %c0_26] : memref<9x256x128xbf16, #tpu.memory_space<vmem>>, vector<1x256x128xbf16>
    %28 = vector.shape_cast %27 : vector<1x256x128xbf16> to vector<256x128xbf16>
    %cst_27 = arith.constant dense<0.000000e+00> : vector<24x128xf32>
    %29 = tpu.matmul %26, %28, %cst_27 {dimension_numbers = #tpu.dot_dimension_numbers<[1], [0], [0], [1], [0, 0, 1, 1], [], []>} : vector<24x256xbf16>, vector<256x128xbf16>, vector<24x128xf32> -> vector<24x128xf32>
    %30 = arith.addf %24, %29 : vector<24x128xf32>
    %c0_28 = arith.constant 0 : index
    %c8 = arith.constant 8 : index
    %c0_29 = arith.constant 0 : index
    %31 = vector.load %arg1[%c0_28, %c8, %c0_29] : memref<1x42x256xbf16, #tpu.memory_space<vmem>>, vector<1x24x256xbf16>
    %32 = vector.shape_cast %31 : vector<1x24x256xbf16> to vector<24x256xbf16>
    %c5 = arith.constant 5 : index
    %c0_30 = arith.constant 0 : index
    %c0_31 = arith.constant 0 : index
    %33 = vector.load %arg2[%c5, %c0_30, %c0_31] : memref<9x256x128xbf16, #tpu.memory_space<vmem>>, vector<1x256x128xbf16>
    %34 = vector.shape_cast %33 : vector<1x256x128xbf16> to vector<256x128xbf16>
    %cst_32 = arith.constant dense<0.000000e+00> : vector<24x128xf32>
    %35 = tpu.matmul %32, %34, %cst_32 {dimension_numbers = #tpu.dot_dimension_numbers<[1], [0], [0], [1], [0, 0, 1, 1], [], []>} : vector<24x256xbf16>, vector<256x128xbf16>, vector<24x128xf32> -> vector<24x128xf32>
    %36 = arith.addf %30, %35 : vector<24x128xf32>
    %c0_33 = arith.constant 0 : index
    %c12 = arith.constant 12 : index
    %c0_34 = arith.constant 0 : index
    %37 = vector.load %arg1[%c0_33, %c12, %c0_34] : memref<1x42x256xbf16, #tpu.memory_space<vmem>>, vector<1x24x256xbf16>
    %38 = vector.shape_cast %37 : vector<1x24x256xbf16> to vector<24x256xbf16>
    %c6_35 = arith.constant 6 : index
    %c0_36 = arith.constant 0 : index
    %c0_37 = arith.constant 0 : index
    %39 = vector.load %arg2[%c6_35, %c0_36, %c0_37] : memref<9x256x128xbf16, #tpu.memory_space<vmem>>, vector<1x256x128xbf16>
    %40 = vector.shape_cast %39 : vector<1x256x128xbf16> to vector<256x128xbf16>
    %cst_38 = arith.constant dense<0.000000e+00> : vector<24x128xf32>
    %41 = tpu.matmul %38, %40, %cst_38 {dimension_numbers = #tpu.dot_dimension_numbers<[1], [0], [0], [1], [0, 0, 1, 1], [], []>} : vector<24x256xbf16>, vector<256x128xbf16>, vector<24x128xf32> -> vector<24x128xf32>
    %42 = arith.addf %36, %41 : vector<24x128xf32>
    %c0_39 = arith.constant 0 : index
    %c13 = arith.constant 13 : index
    %c0_40 = arith.constant 0 : index
    %43 = vector.load %arg1[%c0_39, %c13, %c0_40] : memref<1x42x256xbf16, #tpu.memory_space<vmem>>, vector<1x24x256xbf16>
    %44 = vector.shape_cast %43 : vector<1x24x256xbf16> to vector<24x256xbf16>
    %c7_41 = arith.constant 7 : index
    %c0_42 = arith.constant 0 : index
    %c0_43 = arith.constant 0 : index
    %45 = vector.load %arg2[%c7_41, %c0_42, %c0_43] : memref<9x256x128xbf16, #tpu.memory_space<vmem>>, vector<1x256x128xbf16>
    %46 = vector.shape_cast %45 : vector<1x256x128xbf16> to vector<256x128xbf16>
    %cst_44 = arith.constant dense<0.000000e+00> : vector<24x128xf32>
    %47 = tpu.matmul %44, %46, %cst_44 {dimension_numbers = #tpu.dot_dimension_numbers<[1], [0], [0], [1], [0, 0, 1, 1], [], []>} : vector<24x256xbf16>, vector<256x128xbf16>, vector<24x128xf32> -> vector<24x128xf32>
    %48 = arith.addf %42, %47 : vector<24x128xf32>
    %c0_45 = arith.constant 0 : index
    %c14 = arith.constant 14 : index
    %c0_46 = arith.constant 0 : index
    %49 = vector.load %arg1[%c0_45, %c14, %c0_46] : memref<1x42x256xbf16, #tpu.memory_space<vmem>>, vector<1x24x256xbf16>
    %50 = vector.shape_cast %49 : vector<1x24x256xbf16> to vector<24x256xbf16>
    %c8_47 = arith.constant 8 : index
    %c0_48 = arith.constant 0 : index
    %c0_49 = arith.constant 0 : index
    %51 = vector.load %arg2[%c8_47, %c0_48, %c0_49] : memref<9x256x128xbf16, #tpu.memory_space<vmem>>, vector<1x256x128xbf16>
    %52 = vector.shape_cast %51 : vector<1x256x128xbf16> to vector<256x128xbf16>
    %cst_50 = arith.constant dense<0.000000e+00> : vector<24x128xf32>
    %53 = tpu.matmul %50, %52, %cst_50 {dimension_numbers = #tpu.dot_dimension_numbers<[1], [0], [0], [1], [0, 0, 1, 1], [], []>} : vector<24x256xbf16>, vector<256x128xbf16>, vector<24x128xf32> -> vector<24x128xf32>
    %54 = arith.addf %48, %53 : vector<24x128xf32>
    %c0_51 = arith.constant 0 : index
    %c0_52 = arith.constant 0 : index
    %55 = vector.load %arg3[%c0_51, %c0_52] : memref<1x128xf32, #tpu.memory_space<vmem>>, vector<1x128xf32>
    %56 = vector.broadcast %55 : vector<1x128xf32> to vector<24x128xf32>
    %57 = arith.addf %54, %56 : vector<24x128xf32>
    %58 = arith.truncf %57 : vector<24x128xf32> to vector<24x128xbf16>
    %c0_53 = arith.constant 0 : index
    %c0_54 = arith.constant 0 : index
    %c0_55 = arith.constant 0 : index
    %59 = vector.load %arg4[%c0_53, %c0_54, %c0_55] : memref<1x24x128xbf16, #tpu.memory_space<vmem>>, vector<1x24x128xbf16>
    %60 = vector.shape_cast %59 : vector<1x24x128xbf16> to vector<24x128xbf16>
    %61 = vector.shape_cast %58 : vector<24x128xbf16> to vector<1x24x128xbf16>
    tpu.vector_store %arg4[%c0_53, %c0_54, %c0_55], %61 {strides = array<i32>} : memref<1x24x128xbf16, #tpu.memory_space<vmem>>, vector<1x24x128xbf16>,
    return
  }
  func.func @transform_0(%arg0: i32) -> (i32, i32, i32) {
    %c0_i32 = arith.constant 0 : i32
    %c0_i32_0 = arith.constant 0 : i32
    %c0_i32_1 = arith.constant 0 : i32
    return %arg0, %c0_i32, %c0_i32_0 : i32, i32, i32
  }
  func.func @transform_1(%arg0: i32) -> (i32, i32, i32) {
    %c0_i32 = arith.constant 0 : i32
    %c0_i32_0 = arith.constant 0 : i32
    %c0_i32_1 = arith.constant 0 : i32
    %c0_i32_2 = arith.constant 0 : i32
    return %c0_i32, %c0_i32_0, %c0_i32_1 : i32, i32, i32
  }
  func.func @transform_2(%arg0: i32) -> (i32, i32) {
    %c0_i32 = arith.constant 0 : i32
    %c0_i32_0 = arith.constant 0 : i32
    %c0_i32_1 = arith.constant 0 : i32
    return %c0_i32, %c0_i32_0 : i32, i32
  }
  func.func @transform_3(%arg0: i32) -> (i32, i32, i32) {
    %c0_i32 = arith.constant 0 : i32
    %c0_i32_0 = arith.constant 0 : i32
    %c0_i32_1 = arith.constant 0 : i32
    return %arg0, %c0_i32, %c0_i32_0 : i32, i32, i32
  }
}

</mosaic_0001>

<llo_original>
// kernel: tpu_custom_call.1
$region0: #{tpu_custom_call.1}
  #allocation0 [shape = 'u32[]', space=smem, size = 0x4, offset = 0x4, fixed_abs, tag = 'smem constant byte address 0x4 - core index']
  #allocation1 [shape = 'u32[72,128]{1,0:T(1,128)}', space=vmem, size = 0x9000, scoped, tag = 'internal scratch']
  %s0 = inlined_call_operand.vmem [shape: bf16[4,42,256], index: 0, kind: input, shape index: {}]
  %s1 = inlined_call_operand.hbm [shape: bf16[9,256,128], index: 1, kind: input, shape index: {}]
  %s2 = inlined_call_operand.vmem [shape: f32[1,128], index: 2, kind: input, shape index: {}]
  %s3 = inlined_call_operand.hbm [shape: bf16[4,24,128], index: 3, kind: output, shape index: {}]
  %s4 = sld [smem:[#allocation0]]
  $region49: #{tpu_custom_call.1} parent=0
    _
  %s6 = ssub.s32 1, %s4
  %s7 = scalar_select 0, %s6, %s4
  $region1: #{tpu_custom_call.1} parent=0
    #allocation2 [shape = 'u8[589824]{0}', space=vmem, size = 0x90000, scoped, tag = 'input window, operand 1, single buffered']
    #allocation3 [shape = 's32[2]{0}', space=sflag, size = 0x8, scoped, tag = 'scoped memory for tpu_custom_call.1']
    #allocation4 [shape = 's32[2]{0}', space=sflag, size = 0x8, scoped, tag = 'scoped memory for tpu_custom_call.1']
    #allocation5 [shape = 'u8[12288]{0}', space=vmem, size = 0x3000, scoped, tag = 'output window, operand 0']
    %8 = vsyncpa [#allocation3], 0
    %9 = vsyncpa [#allocation4], 0
    %s10 = scalar_lea.sflag [#allocation4], 1
    %11 = vsyncpa %s10, 0
    loop: start=0, step=1, limit=6
    $region2: #{tpu_custom_call.1} parent=1 // loop_pre_header
      _
    $region3: #{tpu_custom_call.1} parent=1 // loop_header
      %s13 = sphi 0, %s17
      %p14 = scmp.ge.s32.totalorder %s13, 6
      %s23 = sphi 0, %s25
      %s26 = sphi 0, %s23
      %s27 = sphi 0, %s26
      %s43 = sphi 0, %s27
      %s47 = sphi 0, %s47
      %s49 = sphi 0, %s47
      %s50 = sphi 0, %s49
      %s64 = sphi 0, %s50
      %s68 = sphi 0, %s68
      %s70 = sphi 0, %s68
      %s71 = sphi 0, %s70
      %s85 = sphi 0, %s71
      %s91 = sphi 0, %s93
      %s94 = sphi 0, %s91
      %s95 = sphi 0, %s94
      %s111 = sphi 0, %s95
    $region4: #{tpu_custom_call.1} parent=1 // loop_header_branch
      %16 = sbr.rel (%p14) target = $region8
    $region5: #{tpu_custom_call.1} parent=1 // loop_body
      %s18 = ssub.s32 %s13, 1
      %s19 = ssub.s32 %s13, 2
      %s20 = sadd.s32 %s13, 1
      %s21 = ssub.s32 %s13, %s20
      %p22 = scmp.eq.s32.totalorder %s21, 0
      %s24 = sadd.s32 %s23, 1
      %s25 = scalar_select %p22, %s23, %s24
      %p28 = pneg %p22
      %p29 = scmp.eq.s32.totalorder %s13, 3
      %p30 = por %p28, %p29
      %p31 = scmp.ne.s32.totalorder %s23, %s26
      %p32 = scmp.eq.s32.totalorder %s13, 0
      %p33 = por %p31, %p32
      %p34 = scmp.ne.s32.totalorder %s23, %s26
      %p35 = scmp.eq.s32.totalorder %s18, 3
      %p36 = por %p34, %p35
      %p37 = scmp.ne.s32.totalorder %s26, %s27
      %p38 = scmp.eq.s32.totalorder %s18, 0
      %p39 = por %p37, %p38
      %p40 = scmp.ne.s32.totalorder %s26, %s27
      %p41 = scmp.eq.s32.totalorder %s19, 3
      %p42 = por %p40, %p41
      %p44 = scmp.ne.s32.totalorder %s27, %s43
      %p45 = scmp.eq.s32.totalorder %s19, 0
      %p46 = por %p44, %p45
      %s48 = sadd.s32 %s47, 1
      %p51 = scmp.eq.s32.totalorder %s13, 3
      %p52 = scmp.ne.s32.totalorder %s47, %s49
      %p53 = scmp.eq.s32.totalorder %s13, 0
      %p54 = por %p52, %p53
      %p55 = scmp.ne.s32.totalorder %s47, %s49
      %p56 = scmp.eq.s32.totalorder %s18, 3
      %p57 = por %p55, %p56
      %p58 = scmp.ne.s32.totalorder %s49, %s50
      %p59 = scmp.eq.s32.totalorder %s18, 0
      %p60 = por %p58, %p59
      %p61 = scmp.ne.s32.totalorder %s49, %s50
      %p62 = scmp.eq.s32.totalorder %s19, 3
      %p63 = por %p61, %p62
      %p65 = scmp.ne.s32.totalorder %s50, %s64
      %p66 = scmp.eq.s32.totalorder %s19, 0
      %p67 = por %p65, %p66
      %s69 = sadd.s32 %s68, 1
      %p72 = scmp.eq.s32.totalorder %s13, 3
      %p73 = scmp.ne.s32.totalorder %s68, %s70
      %p74 = scmp.eq.s32.totalorder %s13, 0
      %p75 = por %p73, %p74
      %p76 = scmp.ne.s32.totalorder %s68, %s70
      %p77 = scmp.eq.s32.totalorder %s18, 3
      %p78 = por %p76, %p77
      %p79 = scmp.ne.s32.totalorder %s70, %s71
      %p80 = scmp.eq.s32.totalorder %s18, 0
      %p81 = por %p79, %p80
      %p82 = scmp.ne.s32.totalorder %s70, %s71
      %p83 = scmp.eq.s32.totalorder %s19, 3
      %p84 = por %p82, %p83
      %p86 = scmp.ne.s32.totalorder %s71, %s85
      %p87 = scmp.eq.s32.totalorder %s19, 0
      %p88 = por %p86, %p87
      %s89 = ssub.s32 %s13, %s20
      %p90 = scmp.eq.s32.totalorder %s89, 0
      %s92 = sadd.s32 %s91, 1
      %s93 = scalar_select %p90, %s91, %s92
      %p96 = pneg %p90
      %p97 = scmp.eq.s32.totalorder %s13, 3
      %p98 = por %p96, %p97
      %p99 = scmp.ne.s32.totalorder %s91, %s94
      %p100 = scmp.eq.s32.totalorder %s13, 0
      %p101 = por %p99, %p100
      %p102 = scmp.ne.s32.totalorder %s91, %s94
      %p103 = scmp.eq.s32.totalorder %s18, 3
      %p104 = por %p102, %p103
      %p105 = scmp.ne.s32.totalorder %s94, %s95
      %p106 = scmp.eq.s32.totalorder %s18, 0
      %p107 = por %p105, %p106
      %p108 = scmp.ne.s32.totalorder %s94, %s95
      %p109 = scmp.eq.s32.totalorder %s19, 3
      %p110 = por %p108, %p109
      %p112 = scmp.ne.s32.totalorder %s95, %s111
      %p113 = scmp.eq.s32.totalorder %s19, 0
      %p114 = por %p112, %p113
      %p115 = scmp.le.s32.totalorder 1, %s13
      %p116 = scmp.lt.s32.totalorder %s13, 5
      %p117 = pnand %p115, %p116
      %p118 = pneg %p117
      // Predicated region
      $region9: #{tpu_custom_call.1} parent=5 // pred_check
        _
      $region10: #{tpu_custom_call.1} parent=5 // pred_check_branch
        %120 = sbr.rel (%p117) target = $region12
      $region11: #{tpu_custom_call.1} parent=5 // pred_region
        %s121 = ssub.s32 %s13, 1
        // Predicated region
        $region13: #{tpu_custom_call.1} parent=11 // pred_check
          %p122 = pneg %p60
        $region14: #{tpu_custom_call.1} parent=11 // pred_check_branch
          %124 = sbr.rel (%p122) target = $region16
        $region15: #{tpu_custom_call.1} parent=11 // pred_region
          %126 = vsyncadd [#allocation3], 0
          %s127 = sshll.u32 %s1, 4
          %s128 = int_to_ptr.hbm [resolvable:$true] %s127
          %s129 = sshll.u32 [#allocation2], 4
          %s130 = int_to_ptr.vmem [resolvable:$true] %s129
          %135 = dma.hbm_to_vmem [thread:$0]  %s128, 18432, %s130, [#allocation3], 64, 64, 4
        $region16: #{tpu_custom_call.1} parent=11 // pred_fallthru
          _
        // Predicated region
        $region17: #{tpu_custom_call.1} parent=11 // pred_check
          %p136 = pneg %p81
        $region18: #{tpu_custom_call.1} parent=11 // pred_check_branch
          %138 = sbr.rel (%p136) target = $region20
        $region19: #{tpu_custom_call.1} parent=11 // pred_region
          _
        $region20: #{tpu_custom_call.1} parent=11 // pred_fallthru
          _
      $region12: #{tpu_custom_call.1} parent=5 // pred_fallthru
        _
      %p139 = scmp.lt.s32.totalorder %s13, 4
      // Predicated region
      $region21: #{tpu_custom_call.1} parent=5 // pred_check
        %p140 = pneg %p139
      $region22: #{tpu_custom_call.1} parent=5 // pred_check_branch
        %142 = sbr.rel (%p140) target = $region24
      $region23: #{tpu_custom_call.1} parent=5 // pred_region
        // Predicated region
        $region25: #{tpu_custom_call.1} parent=23 // pred_check
          %p143 = pneg %p33
        $region26: #{tpu_custom_call.1} parent=23 // pred_check_branch
          %145 = sbr.rel (%p143) target = $region28
        $region27: #{tpu_custom_call.1} parent=23 // pred_region
          %p146 = scmp.lt.s32.totalorder %s13, 3
          %s147 = scalar_select %p146, %s13, 3
          %s148 = smul.addr %s147, 12
          %s149 = smul.addr %s148, 4
          %s150 = scalar_lea.vmem %s0, %s149
        $region28: #{tpu_custom_call.1} parent=23 // pred_fallthru
          _
      $region24: #{tpu_custom_call.1} parent=5 // pred_fallthru
        _
      %p151 = scmp.le.s32.totalorder 1, %s13
      %p152 = scmp.lt.s32.totalorder %s13, 5
      %p153 = pnand %p151, %p152
      %p154 = pneg %p153
      // Predicated region
      $region29: #{tpu_custom_call.1} parent=5 // pred_check
        _
      $region30: #{tpu_custom_call.1} parent=5 // pred_check_branch
        %156 = sbr.rel (%p153) target = $region32
      $region31: #{tpu_custom_call.1} parent=5 // pred_region
        %s157 = ssub.s32 %s13, 1
        // Predicated region
        $region33: #{tpu_custom_call.1} parent=31 // pred_check
          %p158 = pneg %p60
        $region34: #{tpu_custom_call.1} parent=31 // pred_check_branch
          %160 = sbr.rel (%p158) target = $region36
        $region35: #{tpu_custom_call.1} parent=31 // pred_region
          %162 = dma.done [#allocation3], 18432
        $region36: #{tpu_custom_call.1} parent=31 // pred_fallthru
          _
        %p163 = scmp.lt.s32.totalorder %s18, 3
        %s164 = scalar_select %p163, %s18, 3
        %s165 = smul.addr %s164, 12
        %s166 = smul.addr %s165, 4
        %s167 = scalar_lea.vmem %s0, %s166
        %p168 = pneg %p39
        %p169 = pneg %p36
        %p170 = pneg %p60
        %p171 = pneg %p57
        %p172 = pneg %p81
        %p173 = pneg %p78
        %p174 = pneg %p107
        %p175 = pneg %p104
        %s176 = sand.u32 %s94, 1
        %s177 = scalar_lea.sflag [#allocation4], %s176
        %s178 = sand.u32 %s94, 1
        %s179 = smul.addr %s178, 12
        %s180 = scalar_lea.vmem [#allocation5], %s179
        %p181 = scmp.lt.s32.totalorder %s18, 3
        %s182 = scalar_select %p181, %s18, 3
        %s183 = smul.addr %s182, 12
        %s184 = smul.addr %s183, 4
        %s185 = scalar_lea.vmem %s0, %s184
        %v186 = vld [vmem:[%s185] sm:$0xff]
        %v187 = vld [vmem:[%s185 + $0x8] sm:$0xff]
        %v188 = vld [vmem:[%s185 + $0x10] sm:$0xff]
        %v189 = vld [vmem:[#allocation2] sm:$0xf]
        %v190 = vld [vmem:[#allocation2 + $0x4] sm:$0xf]
        %v191 = vld [vmem:[#allocation2 + $0x8] sm:$0xf]
        %v192 = vld [vmem:[#allocation2 + $0xc] sm:$0xf]
        %v193 = vld [vmem:[#allocation2 + $0x10] sm:$0xf]
        %v194 = vld [vmem:[#allocation2 + $0x14] sm:$0xf]
        %v195 = vld [vmem:[#allocation2 + $0x18] sm:$0xf]
        %v196 = vld [vmem:[#allocation2 + $0x1c] sm:$0xf]
        %v197 = vld [vmem:[#allocation2 + $0x20] sm:$0xf]
        %v198 = vld [vmem:[#allocation2 + $0x24] sm:$0xf]
        %v199 = vld [vmem:[#allocation2 + $0x28] sm:$0xf]
        %v200 = vld [vmem:[#allocation2 + $0x2c] sm:$0xf]
        %v201 = vld [vmem:[#allocation2 + $0x30] sm:$0xf]
        %v202 = vld [vmem:[#allocation2 + $0x34] sm:$0xf]
        %v203 = vld [vmem:[#allocation2 + $0x38] sm:$0xf]
        %v204 = vld [vmem:[#allocation2 + $0x3c] sm:$0xf]
        %v205 = vld [vmem:[#allocation2 + $0x40] sm:$0xf]
        %v206 = vld [vmem:[#allocation2 + $0x44] sm:$0xf]
        %v207 = vld [vmem:[#allocation2 + $0x48] sm:$0xf]
        %v208 = vld [vmem:[#allocation2 + $0x4c] sm:$0xf]
        %v209 = vld [vmem:[#allocation2 + $0x50] sm:$0xf]
        %v210 = vld [vmem:[#allocation2 + $0x54] sm:$0xf]
        %v211 = vld [vmem:[#allocation2 + $0x58] sm:$0xf]
        %v212 = vld [vmem:[#allocation2 + $0x5c] sm:$0xf]
        %v213 = vld [vmem:[#allocation2 + $0x60] sm:$0xf]
        %v214 = vld [vmem:[#allocation2 + $0x64] sm:$0xf]
        %v215 = vld [vmem:[#allocation2 + $0x68] sm:$0xf]
        %v216 = vld [vmem:[#allocation2 + $0x6c] sm:$0xf]
        %v217 = vld [vmem:[#allocation2 + $0x70] sm:$0xf]
        %v218 = vld [vmem:[#allocation2 + $0x74] sm:$0xf]
        %v219 = vld [vmem:[#allocation2 + $0x78] sm:$0xf]
        %v220 = vld [vmem:[#allocation2 + $0x7c] sm:$0xf]
        %v221 = vld [vmem:[%s185 + $0x18] sm:$0x11]
        %s222 = scalar_lea.vmem [#allocation2], 128
        %v223 = vld [vmem:[%s222] sm:$0xf]
        %v224 = vld [vmem:[%s222 + $0x4] sm:$0xf]
        %v225 = vld [vmem:[%s222 + $0x8] sm:$0xf]
        %v226 = vld [vmem:[%s222 + $0xc] sm:$0xf]
        %v227 = vld [vmem:[%s222 + $0x10] sm:$0xf]
        %v228 = vld [vmem:[%s222 + $0x14] sm:$0xf]
        %v229 = vld [vmem:[%s222 + $0x18] sm:$0xf]
        %v230 = vld [vmem:[%s222 + $0x1c] sm:$0xf]
        %v231 = vld [vmem:[%s222 + $0x20] sm:$0xf]
        %v232 = vld [vmem:[%s222 + $0x24] sm:$0xf]
        %v233 = vld [vmem:[%s222 + $0x28] sm:$0xf]
        %v234 = vld [vmem:[%s222 + $0x2c] sm:$0xf]
        %v235 = vld [vmem:[%s222 + $0x30] sm:$0xf]
        %v236 = vld [vmem:[%s222 + $0x34] sm:$0xf]
        %v237 = vld [vmem:[%s222 + $0x38] sm:$0xf]
        %v238 = vld [vmem:[%s222 + $0x3c] sm:$0xf]
        %v239 = vld [vmem:[%s222 + $0x40] sm:$0xf]
        %v240 = vld [vmem:[%s222 + $0x44] sm:$0xf]
        %v241 = vld [vmem:[%s222 + $0x48] sm:$0xf]
        %v242 = vld [vmem:[%s222 + $0x4c] sm:$0xf]
        %v243 = vld [vmem:[%s222 + $0x50] sm:$0xf]
        %v244 = vld [vmem:[%s222 + $0x54] sm:$0xf]
        %v245 = vld [vmem:[%s222 + $0x58] sm:$0xf]
        %v246 = vld [vmem:[%s222 + $0x5c] sm:$0xf]
        %v247 = vld [vmem:[%s222 + $0x60] sm:$0xf]
        %v248 = vld [vmem:[%s222 + $0x64] sm:$0xf]
        %v249 = vld [vmem:[%s222 + $0x68] sm:$0xf]
        %v250 = vld [vmem:[%s222 + $0x6c] sm:$0xf]
        %v251 = vld [vmem:[%s222 + $0x70] sm:$0xf]
        %v252 = vld [vmem:[%s222 + $0x74] sm:$0xf]
        %v253 = vld [vmem:[%s222 + $0x78] sm:$0xf]
        %v254 = vld [vmem:[%s222 + $0x7c] sm:$0xf]
        %v259 = vunpack.c.l.b16 %v186
        %v260 = vunpack.c.h.b16 %v186
        %v261 = vunpack.c.l.b16 %v187
        %v262 = vunpack.c.h.b16 %v187
        %v263 = vunpack.c.l.b16 %v188
        %v264 = vunpack.c.h.b16 %v188
        %v265 = vunpack.c.l.b16 %v221
        %v266 = vunpack.c.h.b16 %v221
        %v267 = vpack.c.b16 %v261, %v259
        %v268 = vpack.c.b16 %v262, %v260
        %v269 = vpack.c.b16 %v265, %v263
        %v270 = vpack.c.b16 %v266, %v264
        %vm271 = vsmask.f32 7424
        %v273 = vshrl.u32 %v267, 16
        %v275 = vshll.u32 %v267, 16
        %v277 = vrot.slane %v275, 1
        %v278 = vor.u32 %v273, %v277
        %v280 = vshll.u32 %v269, 16
        %v282 = vrot.slane %v280, 1
        %v283 = vsel %vm271, %v278, %v282
        %v285 = vshrl.u32 %v268, 16
        %v287 = vshll.u32 %v268, 16
        %v289 = vrot.slane %v287, 1
        %v290 = vor.u32 %v285, %v289
        %v292 = vshll.u32 %v270, 16
        %v294 = vrot.slane %v292, 1
        %v295 = vsel %vm271, %v290, %v294
        %v296 = vshrl.u32 %v269, 16
        %v298 = vor.u32 %v296, %v282
        %v299 = vshrl.u32 %v270, 16
        %v301 = vor.u32 %v299, %v294
        %v338 = vunpack.c.l.b16 %v223
        %v339 = vunpack.c.l.b16 %v224
        %v340 = vunpack.c.l.b16 %v225
        %v341 = vunpack.c.l.b16 %v226
        %v342 = vunpack.c.l.b16 %v227
        %v343 = vunpack.c.l.b16 %v228
        %v344 = vunpack.c.l.b16 %v229
        %v345 = vunpack.c.l.b16 %v230
        %v346 = vunpack.c.l.b16 %v231
        %v347 = vunpack.c.l.b16 %v232
        %v348 = vunpack.c.l.b16 %v233
        %v349 = vunpack.c.l.b16 %v234
        %v350 = vunpack.c.l.b16 %v235
        %v351 = vunpack.c.l.b16 %v236
        %v352 = vunpack.c.l.b16 %v237
        %v353 = vunpack.c.l.b16 %v238
        %v354 = vunpack.c.l.b16 %v239
        %v355 = vunpack.c.l.b16 %v240
        %v356 = vunpack.c.l.b16 %v241
        %v357 = vunpack.c.l.b16 %v242
        %v358 = vunpack.c.l.b16 %v243
        %v359 = vunpack.c.l.b16 %v244
        %v360 = vunpack.c.l.b16 %v245
        %v361 = vunpack.c.l.b16 %v246
        %v362 = vunpack.c.l.b16 %v247
        %v363 = vunpack.c.l.b16 %v248
        %v364 = vunpack.c.l.b16 %v249
        %v365 = vunpack.c.l.b16 %v250
        %v366 = vunpack.c.l.b16 %v251
        %v367 = vunpack.c.l.b16 %v252
        %v368 = vunpack.c.l.b16 %v253
        %v369 = vunpack.c.l.b16 %v254
        %v370 = vpack.c.b16 %v339, %v338
        %v371 = vpack.c.b16 %v341, %v340
        %v372 = vpack.c.b16 %v343, %v342
        %v373 = vpack.c.b16 %v345, %v344
        %v374 = vpack.c.b16 %v347, %v346
        %v375 = vpack.c.b16 %v349, %v348
        %v376 = vpack.c.b16 %v351, %v350
        %v377 = vpack.c.b16 %v353, %v352
        %v378 = vpack.c.b16 %v355, %v354
        %v379 = vpack.c.b16 %v357, %v356
        %v380 = vpack.c.b16 %v359, %v358
        %v381 = vpack.c.b16 %v361, %v360
        %v382 = vpack.c.b16 %v363, %v362
        %v383 = vpack.c.b16 %v365, %v364
        %v384 = vpack.c.b16 %v367, %v366
        %v385 = vpack.c.b16 %v369, %v368
        %402 = vmatpush.bf16.msra.mxu0 %v377
        %403 = vmatpush.bf16.msra.mxu0 %v376
        %404 = vmatpush.bf16.msra.mxu0 %v375
        %405 = vmatpush.bf16.msra.mxu0 %v374
        %406 = vmatpush.bf16.msra.mxu0 %v373
        %407 = vmatpush.bf16.msra.mxu0 %v372
        %408 = vmatpush.bf16.msra.mxu0 %v371
        %409 = vmatpush.bf16.msra.mxu0 %v370
        %410 = vmatmul.bf16.gmra.mxu0 %v283
        %v411 = vpop.f32.mrf.mxu0
        %v412 = vadd.f32 0.0, %v411
        %v413 = vpop.f32.mrf.mxu0
        %v414 = vadd.f32 0.0, %v413
        %415 = vmatmul.bf16.gmra.mxu0 %v298
        %v416 = vpop.f32.mrf.mxu0
        %v417 = vadd.f32 0.0, %v416
        %v418 = vpop.f32.mrf.mxu0
        %419 = vdwg.mxu0
        %420 = vmatpush.bf16.msra.mxu0 %v385
        %421 = vmatpush.bf16.msra.mxu0 %v384
        %422 = vmatpush.bf16.msra.mxu0 %v383
        %423 = vmatpush.bf16.msra.mxu0 %v382
        %424 = vmatpush.bf16.msra.mxu0 %v381
        %425 = vmatpush.bf16.msra.mxu0 %v380
        %426 = vmatpush.bf16.msra.mxu0 %v379
        %427 = vmatpush.bf16.msra.mxu0 %v378
        %428 = vmatmul.bf16.gmra.mxu0 %v295
        %v429 = vpop.f32.mrf.mxu0
        %v430 = vadd.f32 %v412, %v429
        %v431 = vpop.f32.mrf.mxu0
        %v432 = vadd.f32 %v414, %v431
        %433 = vmatmul.bf16.gmra.mxu0 %v301
        %v434 = vpop.f32.mrf.mxu0
        %v435 = vadd.f32 %v417, %v434
        %v436 = vpop.f32.mrf.mxu0
        %437 = vdwg.mxu0
        %v438 = vpack.c.b16 %v263, %v263
        %v439 = vpack.c.b16 %v264, %v264
        %v476 = vunpack.c.l.b16 %v189
        %v477 = vunpack.c.l.b16 %v190
        %v478 = vunpack.c.l.b16 %v191
        %v479 = vunpack.c.l.b16 %v192
        %v480 = vunpack.c.l.b16 %v193
        %v481 = vunpack.c.l.b16 %v194
        %v482 = vunpack.c.l.b16 %v195
        %v483 = vunpack.c.l.b16 %v196
        %v484 = vunpack.c.l.b16 %v197
        %v485 = vunpack.c.l.b16 %v198
        %v486 = vunpack.c.l.b16 %v199
        %v487 = vunpack.c.l.b16 %v200
        %v488 = vunpack.c.l.b16 %v201
        %v489 = vunpack.c.l.b16 %v202
        %v490 = vunpack.c.l.b16 %v203
        %v491 = vunpack.c.l.b16 %v204
        %v492 = vunpack.c.l.b16 %v205
        %v493 = vunpack.c.l.b16 %v206
        %v494 = vunpack.c.l.b16 %v207
        %v495 = vunpack.c.l.b16 %v208
        %v496 = vunpack.c.l.b16 %v209
        %v497 = vunpack.c.l.b16 %v210
        %v498 = vunpack.c.l.b16 %v211
        %v499 = vunpack.c.l.b16 %v212
        %v500 = vunpack.c.l.b16 %v213
        %v501 = vunpack.c.l.b16 %v214
        %v502 = vunpack.c.l.b16 %v215
        %v503 = vunpack.c.l.b16 %v216
        %v504 = vunpack.c.l.b16 %v217
        %v505 = vunpack.c.l.b16 %v218
        %v506 = vunpack.c.l.b16 %v219
        %v507 = vunpack.c.l.b16 %v220
        %v508 = vpack.c.b16 %v477, %v476
        %v509 = vpack.c.b16 %v479, %v478
        %v510 = vpack.c.b16 %v481, %v480
        %v511 = vpack.c.b16 %v483, %v482
        %v512 = vpack.c.b16 %v485, %v484
        %v513 = vpack.c.b16 %v487, %v486
        %v514 = vpack.c.b16 %v489, %v488
        %v515 = vpack.c.b16 %v491, %v490
        %v516 = vpack.c.b16 %v493, %v492
        %v517 = vpack.c.b16 %v495, %v494
        %v518 = vpack.c.b16 %v497, %v496
        %v519 = vpack.c.b16 %v499, %v498
        %v520 = vpack.c.b16 %v501, %v500
        %v521 = vpack.c.b16 %v503, %v502
        %v522 = vpack.c.b16 %v505, %v504
        %v523 = vpack.c.b16 %v507, %v506
        %540 = vmatpush.bf16.msra.mxu0 %v515
        %541 = vmatpush.bf16.msra.mxu0 %v514
        %542 = vmatpush.bf16.msra.mxu0 %v513
        %543 = vmatpush.bf16.msra.mxu0 %v512
        %544 = vmatpush.bf16.msra.mxu0 %v511
        %545 = vmatpush.bf16.msra.mxu0 %v510
        %546 = vmatpush.bf16.msra.mxu0 %v509
        %547 = vmatpush.bf16.msra.mxu0 %v508
        %548 = vmatmul.bf16.gmra.mxu0 %v267
        %v549 = vpop.f32.mrf.mxu0
        %v550 = vadd.f32 %v430, %v549
        %v551 = vpop.f32.mrf.mxu0
        %v552 = vadd.f32 %v432, %v551
        %553 = vmatmul.bf16.gmra.mxu0 %v438
        %v554 = vpop.f32.mrf.mxu0
        %v555 = vadd.f32 %v435, %v554
        %v556 = vpop.f32.mrf.mxu0
        %557 = vdwg.mxu0
        %558 = vmatpush.bf16.msra.mxu0 %v523
        %559 = vmatpush.bf16.msra.mxu0 %v522
        %560 = vmatpush.bf16.msra.mxu0 %v521
        %561 = vmatpush.bf16.msra.mxu0 %v520
        %562 = vmatpush.bf16.msra.mxu0 %v519
        %563 = vmatpush.bf16.msra.mxu0 %v518
        %564 = vmatpush.bf16.msra.mxu0 %v517
        %565 = vmatpush.bf16.msra.mxu0 %v516
        %566 = vmatmul.bf16.gmra.mxu0 %v268
        %v567 = vpop.f32.mrf.mxu0
        %v568 = vadd.f32 %v550, %v567
        %v569 = vpop.f32.mrf.mxu0
        %v570 = vadd.f32 %v552, %v569
        %571 = vmatmul.bf16.gmra.mxu0 %v439
        %v572 = vpop.f32.mrf.mxu0
        %v573 = vadd.f32 %v555, %v572
        %v574 = vpop.f32.mrf.mxu0
        %575 = vdwg.mxu0
        %v576 = vld [vmem:[%s185] sm:$0xee]
        %s577 = scalar_lea.vmem [#allocation2], 256
        %v578 = vld [vmem:[%s577] sm:$0xf]
        %v579 = vld [vmem:[%s577 + $0x4] sm:$0xf]
        %v580 = vld [vmem:[%s577 + $0x8] sm:$0xf]
        %v581 = vld [vmem:[%s577 + $0xc] sm:$0xf]
        %v582 = vld [vmem:[%s577 + $0x10] sm:$0xf]
        %v583 = vld [vmem:[%s577 + $0x14] sm:$0xf]
        %v584 = vld [vmem:[%s577 + $0x18] sm:$0xf]
        %v585 = vld [vmem:[%s577 + $0x1c] sm:$0xf]
        %v586 = vld [vmem:[%s577 + $0x20] sm:$0xf]
        %v587 = vld [vmem:[%s577 + $0x24] sm:$0xf]
        %v588 = vld [vmem:[%s577 + $0x28] sm:$0xf]
        %v589 = vld [vmem:[%s577 + $0x2c] sm:$0xf]
        %v590 = vld [vmem:[%s577 + $0x30] sm:$0xf]
        %v591 = vld [vmem:[%s577 + $0x34] sm:$0xf]
        %v592 = vld [vmem:[%s577 + $0x38] sm:$0xf]
        %v593 = vld [vmem:[%s577 + $0x3c] sm:$0xf]
        %v594 = vld [vmem:[%s577 + $0x40] sm:$0xf]
        %v595 = vld [vmem:[%s577 + $0x44] sm:$0xf]
        %v596 = vld [vmem:[%s577 + $0x48] sm:$0xf]
        %v597 = vld [vmem:[%s577 + $0x4c] sm:$0xf]
        %v598 = vld [vmem:[%s577 + $0x50] sm:$0xf]
        %v599 = vld [vmem:[%s577 + $0x54] sm:$0xf]
        %v600 = vld [vmem:[%s577 + $0x58] sm:$0xf]
        %v601 = vld [vmem:[%s577 + $0x5c] sm:$0xf]
        %v602 = vld [vmem:[%s577 + $0x60] sm:$0xf]
        %v603 = vld [vmem:[%s577 + $0x64] sm:$0xf]
        %v604 = vld [vmem:[%s577 + $0x68] sm:$0xf]
        %v605 = vld [vmem:[%s577 + $0x6c] sm:$0xf]
        %v606 = vld [vmem:[%s577 + $0x70] sm:$0xf]
        %v607 = vld [vmem:[%s577 + $0x74] sm:$0xf]
        %v608 = vld [vmem:[%s577 + $0x78] sm:$0xf]
        %v609 = vld [vmem:[%s577 + $0x7c] sm:$0xf]
        %v611 = vunpack.c.l.b16 %v576
        %v612 = vunpack.c.h.b16 %v576
        %v613 = vpack.c.b16 %v261, %v611
        %v614 = vpack.c.b16 %v262, %v612
        %vm615 = vcmask 1046528
        %v616 = vrot.slane %v613, 1
        %v617 = vrot.slane %v269, 1
        %v618 = vsel %vm615, %v616, %v617
        %v619 = vrot.slane %v614, 1
        %v620 = vrot.slane %v270, 1
        %v621 = vsel %vm615, %v619, %v620
        %v658 = vunpack.c.l.b16 %v578
        %v659 = vunpack.c.l.b16 %v579
        %v660 = vunpack.c.l.b16 %v580
        %v661 = vunpack.c.l.b16 %v581
        %v662 = vunpack.c.l.b16 %v582
        %v663 = vunpack.c.l.b16 %v583
        %v664 = vunpack.c.l.b16 %v584
        %v665 = vunpack.c.l.b16 %v585
        %v666 = vunpack.c.l.b16 %v586
        %v667 = vunpack.c.l.b16 %v587
        %v668 = vunpack.c.l.b16 %v588
        %v669 = vunpack.c.l.b16 %v589
        %v670 = vunpack.c.l.b16 %v590
        %v671 = vunpack.c.l.b16 %v591
        %v672 = vunpack.c.l.b16 %v592
        %v673 = vunpack.c.l.b16 %v593
        %v674 = vunpack.c.l.b16 %v594
        %v675 = vunpack.c.l.b16 %v595
        %v676 = vunpack.c.l.b16 %v596
        %v677 = vunpack.c.l.b16 %v597
        %v678 = vunpack.c.l.b16 %v598
        %v679 = vunpack.c.l.b16 %v599
        %v680 = vunpack.c.l.b16 %v600
        %v681 = vunpack.c.l.b16 %v601
        %v682 = vunpack.c.l.b16 %v602
        %v683 = vunpack.c.l.b16 %v603
        %v684 = vunpack.c.l.b16 %v604
        %v685 = vunpack.c.l.b16 %v605
        %v686 = vunpack.c.l.b16 %v606
        %v687 = vunpack.c.l.b16 %v607
        %v688 = vunpack.c.l.b16 %v608
        %v689 = vunpack.c.l.b16 %v609
        %v690 = vpack.c.b16 %v659, %v658
        %v691 = vpack.c.b16 %v661, %v660
        %v692 = vpack.c.b16 %v663, %v662
        %v693 = vpack.c.b16 %v665, %v664
        %v694 = vpack.c.b16 %v667, %v666
        %v695 = vpack.c.b16 %v669, %v668
        %v696 = vpack.c.b16 %v671, %v670
        %v697 = vpack.c.b16 %v673, %v672
        %v698 = vpack.c.b16 %v675, %v674
        %v699 = vpack.c.b16 %v677, %v676
        %v700 = vpack.c.b16 %v679, %v678
        %v701 = vpack.c.b16 %v681, %v680
        %v702 = vpack.c.b16 %v683, %v682
        %v703 = vpack.c.b16 %v685, %v684
        %v704 = vpack.c.b16 %v687, %v686
        %v705 = vpack.c.b16 %v689, %v688
        %722 = vmatpush.bf16.msra.mxu0 %v697
        %723 = vmatpush.bf16.msra.mxu0 %v696
        %724 = vmatpush.bf16.msra.mxu0 %v695
        %725 = vmatpush.bf16.msra.mxu0 %v694
        %726 = vmatpush.bf16.msra.mxu0 %v693
        %727 = vmatpush.bf16.msra.mxu0 %v692
        %728 = vmatpush.bf16.msra.mxu0 %v691
        %729 = vmatpush.bf16.msra.mxu0 %v690
        %730 = vmatmul.bf16.gmra.mxu0 %v618
        %v731 = vpop.f32.mrf.mxu0
        %v732 = vadd.f32 0.0, %v731
        %v733 = vpop.f32.mrf.mxu0
        %v734 = vadd.f32 0.0, %v733
        %735 = vmatmul.bf16.gmra.mxu0 %v617
        %v736 = vpop.f32.mrf.mxu0
        %v737 = vadd.f32 0.0, %v736
        %v738 = vpop.f32.mrf.mxu0
        %739 = vdwg.mxu0
        %740 = vmatpush.bf16.msra.mxu0 %v705
        %741 = vmatpush.bf16.msra.mxu0 %v704
        %742 = vmatpush.bf16.msra.mxu0 %v703
        %743 = vmatpush.bf16.msra.mxu0 %v702
        %744 = vmatpush.bf16.msra.mxu0 %v701
        %745 = vmatpush.bf16.msra.mxu0 %v700
        %746 = vmatpush.bf16.msra.mxu0 %v699
        %747 = vmatpush.bf16.msra.mxu0 %v698
        %748 = vmatmul.bf16.gmra.mxu0 %v621
        %v749 = vpop.f32.mrf.mxu0
        %v750 = vadd.f32 %v732, %v749
        %v751 = vpop.f32.mrf.mxu0
        %v752 = vadd.f32 %v734, %v751
        %753 = vmatmul.bf16.gmra.mxu0 %v620
        %v754 = vpop.f32.mrf.mxu0
        %v755 = vadd.f32 %v737, %v754
        %v756 = vpop.f32.mrf.mxu0
        %757 = vdwg.mxu0
        %v758 = vadd.f32 %v568, %v750
        %v759 = vadd.f32 %v570, %v752
        %v760 = vadd.f32 %v573, %v755
        %v761 = vld [vmem:[%s185] sm:$0x88]
        %v762 = vld [vmem:[%s185 + $0x18] sm:$0x77]
        %s763 = scalar_lea.vmem [#allocation2], 384
        %v764 = vld [vmem:[%s763] sm:$0xf]
        %v765 = vld [vmem:[%s763 + $0x4] sm:$0xf]
        %v766 = vld [vmem:[%s763 + $0x8] sm:$0xf]
        %v767 = vld [vmem:[%s763 + $0xc] sm:$0xf]
        %v768 = vld [vmem:[%s763 + $0x10] sm:$0xf]
        %v769 = vld [vmem:[%s763 + $0x14] sm:$0xf]
        %v770 = vld [vmem:[%s763 + $0x18] sm:$0xf]
        %v771 = vld [vmem:[%s763 + $0x1c] sm:$0xf]
        %v772 = vld [vmem:[%s763 + $0x20] sm:$0xf]
        %v773 = vld [vmem:[%s763 + $0x24] sm:$0xf]
        %v774 = vld [vmem:[%s763 + $0x28] sm:$0xf]
        %v775 = vld [vmem:[%s763 + $0x2c] sm:$0xf]
        %v776 = vld [vmem:[%s763 + $0x30] sm:$0xf]
        %v777 = vld [vmem:[%s763 + $0x34] sm:$0xf]
        %v778 = vld [vmem:[%s763 + $0x38] sm:$0xf]
        %v779 = vld [vmem:[%s763 + $0x3c] sm:$0xf]
        %v780 = vld [vmem:[%s763 + $0x40] sm:$0xf]
        %v781 = vld [vmem:[%s763 + $0x44] sm:$0xf]
        %v782 = vld [vmem:[%s763 + $0x48] sm:$0xf]
        %v783 = vld [vmem:[%s763 + $0x4c] sm:$0xf]
        %v784 = vld [vmem:[%s763 + $0x50] sm:$0xf]
        %v785 = vld [vmem:[%s763 + $0x54] sm:$0xf]
        %v786 = vld [vmem:[%s763 + $0x58] sm:$0xf]
        %v787 = vld [vmem:[%s763 + $0x5c] sm:$0xf]
        %v788 = vld [vmem:[%s763 + $0x60] sm:$0xf]
        %v789 = vld [vmem:[%s763 + $0x64] sm:$0xf]
        %v790 = vld [vmem:[%s763 + $0x68] sm:$0xf]
        %v791 = vld [vmem:[%s763 + $0x6c] sm:$0xf]
        %v792 = vld [vmem:[%s763 + $0x70] sm:$0xf]
        %v793 = vld [vmem:[%s763 + $0x74] sm:$0xf]
        %v794 = vld [vmem:[%s763 + $0x78] sm:$0xf]
        %v795 = vld [vmem:[%s763 + $0x7c] sm:$0xf]
        %v798 = vunpack.c.l.b16 %v761
        %v799 = vunpack.c.h.b16 %v761
        %v800 = vunpack.c.l.b16 %v762
        %v801 = vunpack.c.h.b16 %v762
        %v802 = vpack.c.b16 %v261, %v798
        %v803 = vpack.c.b16 %v262, %v799
        %v804 = vpack.c.b16 %v800, %v263
        %v805 = vpack.c.b16 %v801, %v264
        %vm806 = vcmask 1044480
        %v807 = vrot.slane %v802, 3
        %v808 = vrot.slane %v804, 3
        %v809 = vsel %vm806, %v807, %v808
        %v810 = vrot.slane %v803, 3
        %v811 = vrot.slane %v805, 3
        %v812 = vsel %vm806, %v810, %v811
        %v849 = vunpack.c.l.b16 %v764
        %v850 = vunpack.c.l.b16 %v765
        %v851 = vunpack.c.l.b16 %v766
        %v852 = vunpack.c.l.b16 %v767
        %v853 = vunpack.c.l.b16 %v768
        %v854 = vunpack.c.l.b16 %v769
        %v855 = vunpack.c.l.b16 %v770
        %v856 = vunpack.c.l.b16 %v771
        %v857 = vunpack.c.l.b16 %v772
        %v858 = vunpack.c.l.b16 %v773
        %v859 = vunpack.c.l.b16 %v774
        %v860 = vunpack.c.l.b16 %v775
        %v861 = vunpack.c.l.b16 %v776
        %v862 = vunpack.c.l.b16 %v777
        %v863 = vunpack.c.l.b16 %v778
        %v864 = vunpack.c.l.b16 %v779
        %v865 = vunpack.c.l.b16 %v780
        %v866 = vunpack.c.l.b16 %v781
        %v867 = vunpack.c.l.b16 %v782
        %v868 = vunpack.c.l.b16 %v783
        %v869 = vunpack.c.l.b16 %v784
        %v870 = vunpack.c.l.b16 %v785
        %v871 = vunpack.c.l.b16 %v786
        %v872 = vunpack.c.l.b16 %v787
        %v873 = vunpack.c.l.b16 %v788
        %v874 = vunpack.c.l.b16 %v789
        %v875 = vunpack.c.l.b16 %v790
        %v876 = vunpack.c.l.b16 %v791
        %v877 = vunpack.c.l.b16 %v792
        %v878 = vunpack.c.l.b16 %v793
        %v879 = vunpack.c.l.b16 %v794
        %v880 = vunpack.c.l.b16 %v795
        %v881 = vpack.c.b16 %v850, %v849
        %v882 = vpack.c.b16 %v852, %v851
        %v883 = vpack.c.b16 %v854, %v853
        %v884 = vpack.c.b16 %v856, %v855
        %v885 = vpack.c.b16 %v858, %v857
        %v886 = vpack.c.b16 %v860, %v859
        %v887 = vpack.c.b16 %v862, %v861
        %v888 = vpack.c.b16 %v864, %v863
        %v889 = vpack.c.b16 %v866, %v865
        %v890 = vpack.c.b16 %v868, %v867
        %v891 = vpack.c.b16 %v870, %v869
        %v892 = vpack.c.b16 %v872, %v871
        %v893 = vpack.c.b16 %v874, %v873
        %v894 = vpack.c.b16 %v876, %v875
        %v895 = vpack.c.b16 %v878, %v877
        %v896 = vpack.c.b16 %v880, %v879
        %913 = vmatpush.bf16.msra.mxu0 %v888
        %914 = vmatpush.bf16.msra.mxu0 %v887
        %915 = vmatpush.bf16.msra.mxu0 %v886
        %916 = vmatpush.bf16.msra.mxu0 %v885
        %917 = vmatpush.bf16.msra.mxu0 %v884
        %918 = vmatpush.bf16.msra.mxu0 %v883
        %919 = vmatpush.bf16.msra.mxu0 %v882
        %920 = vmatpush.bf16.msra.mxu0 %v881
        %921 = vmatmul.bf16.gmra.mxu0 %v809
        %v922 = vpop.f32.mrf.mxu0
        %v923 = vadd.f32 0.0, %v922
        %v924 = vpop.f32.mrf.mxu0
        %v925 = vadd.f32 0.0, %v924
        %926 = vmatmul.bf16.gmra.mxu0 %v808
        %v927 = vpop.f32.mrf.mxu0
        %v928 = vadd.f32 0.0, %v927
        %v929 = vpop.f32.mrf.mxu0
        %930 = vdwg.mxu0
        %931 = vmatpush.bf16.msra.mxu0 %v896
        %932 = vmatpush.bf16.msra.mxu0 %v895
        %933 = vmatpush.bf16.msra.mxu0 %v894
        %934 = vmatpush.bf16.msra.mxu0 %v893
        %935 = vmatpush.bf16.msra.mxu0 %v892
        %936 = vmatpush.bf16.msra.mxu0 %v891
        %937 = vmatpush.bf16.msra.mxu0 %v890
        %938 = vmatpush.bf16.msra.mxu0 %v889
        %939 = vmatmul.bf16.gmra.mxu0 %v812
        %v940 = vpop.f32.mrf.mxu0
        %v941 = vadd.f32 %v923, %v940
        %v942 = vpop.f32.mrf.mxu0
        %v943 = vadd.f32 %v925, %v942
        %944 = vmatmul.bf16.gmra.mxu0 %v811
        %v945 = vpop.f32.mrf.mxu0
        %v946 = vadd.f32 %v928, %v945
        %v947 = vpop.f32.mrf.mxu0
        %948 = vdwg.mxu0
        %v949 = vadd.f32 %v758, %v941
        %v950 = vadd.f32 %v759, %v943
        %v951 = vadd.f32 %v760, %v946
        %v952 = vld [vmem:[%s185 + $0x18] sm:$0xff]
        %s953 = scalar_lea.vmem [#allocation2], 512
        %v954 = vld [vmem:[%s953] sm:$0xf]
        %v955 = vld [vmem:[%s953 + $0x4] sm:$0xf]
        %v956 = vld [vmem:[%s953 + $0x8] sm:$0xf]
        %v957 = vld [vmem:[%s953 + $0xc] sm:$0xf]
        %v958 = vld [vmem:[%s953 + $0x10] sm:$0xf]
        %v959 = vld [vmem:[%s953 + $0x14] sm:$0xf]
        %v960 = vld [vmem:[%s953 + $0x18] sm:$0xf]
        %v961 = vld [vmem:[%s953 + $0x1c] sm:$0xf]
        %v962 = vld [vmem:[%s953 + $0x20] sm:$0xf]
        %v963 = vld [vmem:[%s953 + $0x24] sm:$0xf]
        %v964 = vld [vmem:[%s953 + $0x28] sm:$0xf]
        %v965 = vld [vmem:[%s953 + $0x2c] sm:$0xf]
        %v966 = vld [vmem:[%s953 + $0x30] sm:$0xf]
        %v967 = vld [vmem:[%s953 + $0x34] sm:$0xf]
        %v968 = vld [vmem:[%s953 + $0x38] sm:$0xf]
        %v969 = vld [vmem:[%s953 + $0x3c] sm:$0xf]
        %v970 = vld [vmem:[%s953 + $0x40] sm:$0xf]
        %v971 = vld [vmem:[%s953 + $0x44] sm:$0xf]
        %v972 = vld [vmem:[%s953 + $0x48] sm:$0xf]
        %v973 = vld [vmem:[%s953 + $0x4c] sm:$0xf]
        %v974 = vld [vmem:[%s953 + $0x50] sm:$0xf]
        %v975 = vld [vmem:[%s953 + $0x54] sm:$0xf]
        %v976 = vld [vmem:[%s953 + $0x58] sm:$0xf]
        %v977 = vld [vmem:[%s953 + $0x5c] sm:$0xf]
        %v978 = vld [vmem:[%s953 + $0x60] sm:$0xf]
        %v979 = vld [vmem:[%s953 + $0x64] sm:$0xf]
        %v980 = vld [vmem:[%s953 + $0x68] sm:$0xf]
        %v981 = vld [vmem:[%s953 + $0x6c] sm:$0xf]
        %v982 = vld [vmem:[%s953 + $0x70] sm:$0xf]
        %v983 = vld [vmem:[%s953 + $0x74] sm:$0xf]
        %v984 = vld [vmem:[%s953 + $0x78] sm:$0xf]
        %v985 = vld [vmem:[%s953 + $0x7c] sm:$0xf]
        %v987 = vunpack.c.l.b16 %v952
        %v988 = vunpack.c.h.b16 %v952
        %v989 = vpack.c.b16 %v987, %v263
        %v990 = vpack.c.b16 %v988, %v264
        %vm991 = vsmask.f32 4352
        %v993 = vshrl.u32 %v802, 16
        %v995 = vrot.slane %v993, 3
        %v996 = vshll.u32 %v802, 16
        %v998 = vrot.slane %v996, 4
        %v999 = vor.u32 %v995, %v998
        %v1001 = vshrl.u32 %v989, 16
        %v1003 = vrot.slane %v1001, 3
        %v1004 = vshll.u32 %v989, 16
        %v1006 = vrot.slane %v1004, 4
        %v1007 = vor.u32 %v1003, %v1006
        %v1008 = vsel %vm991, %v999, %v1007
        %v1010 = vshrl.u32 %v803, 16
        %v1012 = vrot.slane %v1010, 3
        %v1013 = vshll.u32 %v803, 16
        %v1015 = vrot.slane %v1013, 4
        %v1016 = vor.u32 %v1012, %v1015
        %v1018 = vshrl.u32 %v990, 16
        %v1020 = vrot.slane %v1018, 3
        %v1021 = vshll.u32 %v990, 16
        %v1023 = vrot.slane %v1021, 4
        %v1024 = vor.u32 %v1020, %v1023
        %v1025 = vsel %vm991, %v1016, %v1024
        %v1062 = vunpack.c.l.b16 %v954
        %v1063 = vunpack.c.l.b16 %v955
        %v1064 = vunpack.c.l.b16 %v956
        %v1065 = vunpack.c.l.b16 %v957
        %v1066 = vunpack.c.l.b16 %v958
        %v1067 = vunpack.c.l.b16 %v959
        %v1068 = vunpack.c.l.b16 %v960
        %v1069 = vunpack.c.l.b16 %v961
        %v1070 = vunpack.c.l.b16 %v962
        %v1071 = vunpack.c.l.b16 %v963
        %v1072 = vunpack.c.l.b16 %v964
        %v1073 = vunpack.c.l.b16 %v965
        %v1074 = vunpack.c.l.b16 %v966
        %v1075 = vunpack.c.l.b16 %v967
        %v1076 = vunpack.c.l.b16 %v968
        %v1077 = vunpack.c.l.b16 %v969
        %v1078 = vunpack.c.l.b16 %v970
        %v1079 = vunpack.c.l.b16 %v971
        %v1080 = vunpack.c.l.b16 %v972
        %v1081 = vunpack.c.l.b16 %v973
        %v1082 = vunpack.c.l.b16 %v974
        %v1083 = vunpack.c.l.b16 %v975
        %v1084 = vunpack.c.l.b16 %v976
        %v1085 = vunpack.c.l.b16 %v977
        %v1086 = vunpack.c.l.b16 %v978
        %v1087 = vunpack.c.l.b16 %v979
        %v1088 = vunpack.c.l.b16 %v980
        %v1089 = vunpack.c.l.b16 %v981
        %v1090 = vunpack.c.l.b16 %v982
        %v1091 = vunpack.c.l.b16 %v983
        %v1092 = vunpack.c.l.b16 %v984
        %v1093 = vunpack.c.l.b16 %v985
        %v1094 = vpack.c.b16 %v1063, %v1062
        %v1095 = vpack.c.b16 %v1065, %v1064
        %v1096 = vpack.c.b16 %v1067, %v1066
        %v1097 = vpack.c.b16 %v1069, %v1068
        %v1098 = vpack.c.b16 %v1071, %v1070
        %v1099 = vpack.c.b16 %v1073, %v1072
        %v1100 = vpack.c.b16 %v1075, %v1074
        %v1101 = vpack.c.b16 %v1077, %v1076
        %v1102 = vpack.c.b16 %v1079, %v1078
        %v1103 = vpack.c.b16 %v1081, %v1080
        %v1104 = vpack.c.b16 %v1083, %v1082
        %v1105 = vpack.c.b16 %v1085, %v1084
        %v1106 = vpack.c.b16 %v1087, %v1086
        %v1107 = vpack.c.b16 %v1089, %v1088
        %v1108 = vpack.c.b16 %v1091, %v1090
        %v1109 = vpack.c.b16 %v1093, %v1092
        %1126 = vmatpush.bf16.msra.mxu0 %v1101
        %1127 = vmatpush.bf16.msra.mxu0 %v1100
        %1128 = vmatpush.bf16.msra.mxu0 %v1099
        %1129 = vmatpush.bf16.msra.mxu0 %v1098
        %1130 = vmatpush.bf16.msra.mxu0 %v1097
        %1131 = vmatpush.bf16.msra.mxu0 %v1096
        %1132 = vmatpush.bf16.msra.mxu0 %v1095
        %1133 = vmatpush.bf16.msra.mxu0 %v1094
        %1134 = vmatmul.bf16.gmra.mxu0 %v1008
        %v1135 = vpop.f32.mrf.mxu0
        %v1136 = vadd.f32 0.0, %v1135
        %v1137 = vpop.f32.mrf.mxu0
        %v1138 = vadd.f32 0.0, %v1137
        %1139 = vmatmul.bf16.gmra.mxu0 %v1007
        %v1140 = vpop.f32.mrf.mxu0
        %v1141 = vadd.f32 0.0, %v1140
        %v1142 = vpop.f32.mrf.mxu0
        %1143 = vdwg.mxu0
        %1144 = vmatpush.bf16.msra.mxu0 %v1109
        %1145 = vmatpush.bf16.msra.mxu0 %v1108
        %1146 = vmatpush.bf16.msra.mxu0 %v1107
        %1147 = vmatpush.bf16.msra.mxu0 %v1106
        %1148 = vmatpush.bf16.msra.mxu0 %v1105
        %1149 = vmatpush.bf16.msra.mxu0 %v1104
        %1150 = vmatpush.bf16.msra.mxu0 %v1103
        %1151 = vmatpush.bf16.msra.mxu0 %v1102
        %1152 = vmatmul.bf16.gmra.mxu0 %v1025
        %v1153 = vpop.f32.mrf.mxu0
        %v1154 = vadd.f32 %v1136, %v1153
        %v1155 = vpop.f32.mrf.mxu0
        %v1156 = vadd.f32 %v1138, %v1155
        %1157 = vmatmul.bf16.gmra.mxu0 %v1024
        %v1158 = vpop.f32.mrf.mxu0
        %v1159 = vadd.f32 %v1141, %v1158
        %v1160 = vpop.f32.mrf.mxu0
        %1161 = vdwg.mxu0
        %v1162 = vadd.f32 %v949, %v1154
        %v1163 = vadd.f32 %v950, %v1156
        %v1164 = vadd.f32 %v951, %v1159
        %s1165 = scalar_lea.vmem [#allocation2], 640
        %v1166 = vld [vmem:[%s1165] sm:$0xf]
        %v1167 = vld [vmem:[%s1165 + $0x4] sm:$0xf]
        %v1168 = vld [vmem:[%s1165 + $0x8] sm:$0xf]
        %v1169 = vld [vmem:[%s1165 + $0xc] sm:$0xf]
        %v1170 = vld [vmem:[%s1165 + $0x10] sm:$0xf]
        %v1171 = vld [vmem:[%s1165 + $0x14] sm:$0xf]
        %v1172 = vld [vmem:[%s1165 + $0x18] sm:$0xf]
        %v1173 = vld [vmem:[%s1165 + $0x1c] sm:$0xf]
        %v1174 = vld [vmem:[%s1165 + $0x20] sm:$0xf]
        %v1175 = vld [vmem:[%s1165 + $0x24] sm:$0xf]
        %v1176 = vld [vmem:[%s1165 + $0x28] sm:$0xf]
        %v1177 = vld [vmem:[%s1165 + $0x2c] sm:$0xf]
        %v1178 = vld [vmem:[%s1165 + $0x30] sm:$0xf]
        %v1179 = vld [vmem:[%s1165 + $0x34] sm:$0xf]
        %v1180 = vld [vmem:[%s1165 + $0x38] sm:$0xf]
        %v1181 = vld [vmem:[%s1165 + $0x3c] sm:$0xf]
        %v1182 = vld [vmem:[%s1165 + $0x40] sm:$0xf]
        %v1183 = vld [vmem:[%s1165 + $0x44] sm:$0xf]
        %v1184 = vld [vmem:[%s1165 + $0x48] sm:$0xf]
        %v1185 = vld [vmem:[%s1165 + $0x4c] sm:$0xf]
        %v1186 = vld [vmem:[%s1165 + $0x50] sm:$0xf]
        %v1187 = vld [vmem:[%s1165 + $0x54] sm:$0xf]
        %v1188 = vld [vmem:[%s1165 + $0x58] sm:$0xf]
        %v1189 = vld [vmem:[%s1165 + $0x5c] sm:$0xf]
        %v1190 = vld [vmem:[%s1165 + $0x60] sm:$0xf]
        %v1191 = vld [vmem:[%s1165 + $0x64] sm:$0xf]
        %v1192 = vld [vmem:[%s1165 + $0x68] sm:$0xf]
        %v1193 = vld [vmem:[%s1165 + $0x6c] sm:$0xf]
        %v1194 = vld [vmem:[%s1165 + $0x70] sm:$0xf]
        %v1195 = vld [vmem:[%s1165 + $0x74] sm:$0xf]
        %v1196 = vld [vmem:[%s1165 + $0x78] sm:$0xf]
        %v1197 = vld [vmem:[%s1165 + $0x7c] sm:$0xf]
        %v1198 = vpack.c.b16 %v263, %v261
        %v1199 = vpack.c.b16 %v264, %v262
        %v1200 = vpack.c.b16 %v987, %v987
        %v1201 = vpack.c.b16 %v988, %v988
        %v1238 = vunpack.c.l.b16 %v1166
        %v1239 = vunpack.c.l.b16 %v1167
        %v1240 = vunpack.c.l.b16 %v1168
        %v1241 = vunpack.c.l.b16 %v1169
        %v1242 = vunpack.c.l.b16 %v1170
        %v1243 = vunpack.c.l.b16 %v1171
        %v1244 = vunpack.c.l.b16 %v1172
        %v1245 = vunpack.c.l.b16 %v1173
        %v1246 = vunpack.c.l.b16 %v1174
        %v1247 = vunpack.c.l.b16 %v1175
        %v1248 = vunpack.c.l.b16 %v1176
        %v1249 = vunpack.c.l.b16 %v1177
        %v1250 = vunpack.c.l.b16 %v1178
        %v1251 = vunpack.c.l.b16 %v1179
        %v1252 = vunpack.c.l.b16 %v1180
        %v1253 = vunpack.c.l.b16 %v1181
        %v1254 = vunpack.c.l.b16 %v1182
        %v1255 = vunpack.c.l.b16 %v1183
        %v1256 = vunpack.c.l.b16 %v1184
        %v1257 = vunpack.c.l.b16 %v1185
        %v1258 = vunpack.c.l.b16 %v1186
        %v1259 = vunpack.c.l.b16 %v1187
        %v1260 = vunpack.c.l.b16 %v1188
        %v1261 = vunpack.c.l.b16 %v1189
        %v1262 = vunpack.c.l.b16 %v1190
        %v1263 = vunpack.c.l.b16 %v1191
        %v1264 = vunpack.c.l.b16 %v1192
        %v1265 = vunpack.c.l.b16 %v1193
        %v1266 = vunpack.c.l.b16 %v1194
        %v1267 = vunpack.c.l.b16 %v1195
        %v1268 = vunpack.c.l.b16 %v1196
        %v1269 = vunpack.c.l.b16 %v1197
        %v1270 = vpack.c.b16 %v1239, %v1238
        %v1271 = vpack.c.b16 %v1241, %v1240
        %v1272 = vpack.c.b16 %v1243, %v1242
        %v1273 = vpack.c.b16 %v1245, %v1244
        %v1274 = vpack.c.b16 %v1247, %v1246
        %v1275 = vpack.c.b16 %v1249, %v1248
        %v1276 = vpack.c.b16 %v1251, %v1250
        %v1277 = vpack.c.b16 %v1253, %v1252
        %v1278 = vpack.c.b16 %v1255, %v1254
        %v1279 = vpack.c.b16 %v1257, %v1256
        %v1280 = vpack.c.b16 %v1259, %v1258
        %v1281 = vpack.c.b16 %v1261, %v1260
        %v1282 = vpack.c.b16 %v1263, %v1262
        %v1283 = vpack.c.b16 %v1265, %v1264
        %v1284 = vpack.c.b16 %v1267, %v1266
        %v1285 = vpack.c.b16 %v1269, %v1268
        %1302 = vmatpush.bf16.msra.mxu0 %v1277
        %1303 = vmatpush.bf16.msra.mxu0 %v1276
        %1304 = vmatpush.bf16.msra.mxu0 %v1275
        %1305 = vmatpush.bf16.msra.mxu0 %v1274
        %1306 = vmatpush.bf16.msra.mxu0 %v1273
        %1307 = vmatpush.bf16.msra.mxu0 %v1272
        %1308 = vmatpush.bf16.msra.mxu0 %v1271
        %1309 = vmatpush.bf16.msra.mxu0 %v1270
        %1310 = vmatmul.bf16.gmra.mxu0 %v1198
        %v1311 = vpop.f32.mrf.mxu0
        %v1312 = vadd.f32 0.0, %v1311
        %v1313 = vpop.f32.mrf.mxu0
        %v1314 = vadd.f32 0.0, %v1313
        %1315 = vmatmul.bf16.gmra.mxu0 %v1200
        %v1316 = vpop.f32.mrf.mxu0
        %v1317 = vadd.f32 0.0, %v1316
        %v1318 = vpop.f32.mrf.mxu0
        %1319 = vdwg.mxu0
        %1320 = vmatpush.bf16.msra.mxu0 %v1285
        %1321 = vmatpush.bf16.msra.mxu0 %v1284
        %1322 = vmatpush.bf16.msra.mxu0 %v1283
        %1323 = vmatpush.bf16.msra.mxu0 %v1282
        %1324 = vmatpush.bf16.msra.mxu0 %v1281
        %1325 = vmatpush.bf16.msra.mxu0 %v1280
        %1326 = vmatpush.bf16.msra.mxu0 %v1279
        %1327 = vmatpush.bf16.msra.mxu0 %v1278
        %1328 = vmatmul.bf16.gmra.mxu0 %v1199
        %v1329 = vpop.f32.mrf.mxu0
        %v1330 = vadd.f32 %v1312, %v1329
        %v1331 = vpop.f32.mrf.mxu0
        %v1332 = vadd.f32 %v1314, %v1331
        %1333 = vmatmul.bf16.gmra.mxu0 %v1201
        %v1334 = vpop.f32.mrf.mxu0
        %v1335 = vadd.f32 %v1317, %v1334
        %v1336 = vpop.f32.mrf.mxu0
        %1337 = vdwg.mxu0
        %v1338 = vadd.f32 %v1162, %v1330
        %v1339 = vadd.f32 %v1163, %v1332
        %v1340 = vadd.f32 %v1164, %v1335
        %v1341 = vld [vmem:[%s185 + $0x8] sm:$0xcc]
        %v1342 = vld [vmem:[%s185 + $0x10] sm:$0xff]
        %v1343 = vld [vmem:[%s185 + $0x18] sm:$0xff]
        %v1344 = vld [vmem:[%s185 + $0x20] sm:$0x33]
        %s1345 = scalar_lea.vmem [#allocation2], 768
        %v1346 = vld [vmem:[%s1345] sm:$0xf]
        %v1347 = vld [vmem:[%s1345 + $0x4] sm:$0xf]
        %v1348 = vld [vmem:[%s1345 + $0x8] sm:$0xf]
        %v1349 = vld [vmem:[%s1345 + $0xc] sm:$0xf]
        %v1350 = vld [vmem:[%s1345 + $0x10] sm:$0xf]
        %v1351 = vld [vmem:[%s1345 + $0x14] sm:$0xf]
        %v1352 = vld [vmem:[%s1345 + $0x18] sm:$0xf]
        %v1353 = vld [vmem:[%s1345 + $0x1c] sm:$0xf]
        %v1354 = vld [vmem:[%s1345 + $0x20] sm:$0xf]
        %v1355 = vld [vmem:[%s1345 + $0x24] sm:$0xf]
        %v1356 = vld [vmem:[%s1345 + $0x28] sm:$0xf]
        %v1357 = vld [vmem:[%s1345 + $0x2c] sm:$0xf]
        %v1358 = vld [vmem:[%s1345 + $0x30] sm:$0xf]
        %v1359 = vld [vmem:[%s1345 + $0x34] sm:$0xf]
        %v1360 = vld [vmem:[%s1345 + $0x38] sm:$0xf]
        %v1361 = vld [vmem:[%s1345 + $0x3c] sm:$0xf]
        %v1362 = vld [vmem:[%s1345 + $0x40] sm:$0xf]
        %v1363 = vld [vmem:[%s1345 + $0x44] sm:$0xf]
        %v1364 = vld [vmem:[%s1345 + $0x48] sm:$0xf]
        %v1365 = vld [vmem:[%s1345 + $0x4c] sm:$0xf]
        %v1366 = vld [vmem:[%s1345 + $0x50] sm:$0xf]
        %v1367 = vld [vmem:[%s1345 + $0x54] sm:$0xf]
        %v1368 = vld [vmem:[%s1345 + $0x58] sm:$0xf]
        %v1369 = vld [vmem:[%s1345 + $0x5c] sm:$0xf]
        %v1370 = vld [vmem:[%s1345 + $0x60] sm:$0xf]
        %v1371 = vld [vmem:[%s1345 + $0x64] sm:$0xf]
        %v1372 = vld [vmem:[%s1345 + $0x68] sm:$0xf]
        %v1373 = vld [vmem:[%s1345 + $0x6c] sm:$0xf]
        %v1374 = vld [vmem:[%s1345 + $0x70] sm:$0xf]
        %v1375 = vld [vmem:[%s1345 + $0x74] sm:$0xf]
        %v1376 = vld [vmem:[%s1345 + $0x78] sm:$0xf]
        %v1377 = vld [vmem:[%s1345 + $0x7c] sm:$0xf]
        %v1382 = vunpack.c.l.b16 %v1341
        %v1383 = vunpack.c.h.b16 %v1341
        %v1384 = vunpack.c.l.b16 %v1342
        %v1385 = vunpack.c.h.b16 %v1342
        %v1386 = vunpack.c.l.b16 %v1343
        %v1387 = vunpack.c.h.b16 %v1343
        %v1388 = vunpack.c.l.b16 %v1344
        %v1389 = vunpack.c.h.b16 %v1344
        %v1390 = vpack.c.b16 %v1384, %v1382
        %v1391 = vpack.c.b16 %v1385, %v1383
        %v1392 = vpack.c.b16 %v1388, %v1386
        %v1393 = vpack.c.b16 %v1389, %v1387
        %vm1394 = vcmask 1045504
        %v1395 = vrot.slane %v1390, 2
        %v1396 = vrot.slane %v1392, 2
        %v1397 = vsel %vm1394, %v1395, %v1396
        %v1398 = vrot.slane %v1391, 2
        %v1399 = vrot.slane %v1393, 2
        %v1400 = vsel %vm1394, %v1398, %v1399
        %v1437 = vunpack.c.l.b16 %v1346
        %v1438 = vunpack.c.l.b16 %v1347
        %v1439 = vunpack.c.l.b16 %v1348
        %v1440 = vunpack.c.l.b16 %v1349
        %v1441 = vunpack.c.l.b16 %v1350
        %v1442 = vunpack.c.l.b16 %v1351
        %v1443 = vunpack.c.l.b16 %v1352
        %v1444 = vunpack.c.l.b16 %v1353
        %v1445 = vunpack.c.l.b16 %v1354
        %v1446 = vunpack.c.l.b16 %v1355
        %v1447 = vunpack.c.l.b16 %v1356
        %v1448 = vunpack.c.l.b16 %v1357
        %v1449 = vunpack.c.l.b16 %v1358
        %v1450 = vunpack.c.l.b16 %v1359
        %v1451 = vunpack.c.l.b16 %v1360
        %v1452 = vunpack.c.l.b16 %v1361
        %v1453 = vunpack.c.l.b16 %v1362
        %v1454 = vunpack.c.l.b16 %v1363
        %v1455 = vunpack.c.l.b16 %v1364
        %v1456 = vunpack.c.l.b16 %v1365
        %v1457 = vunpack.c.l.b16 %v1366
        %v1458 = vunpack.c.l.b16 %v1367
        %v1459 = vunpack.c.l.b16 %v1368
        %v1460 = vunpack.c.l.b16 %v1369
        %v1461 = vunpack.c.l.b16 %v1370
        %v1462 = vunpack.c.l.b16 %v1371
        %v1463 = vunpack.c.l.b16 %v1372
        %v1464 = vunpack.c.l.b16 %v1373
        %v1465 = vunpack.c.l.b16 %v1374
        %v1466 = vunpack.c.l.b16 %v1375
        %v1467 = vunpack.c.l.b16 %v1376
        %v1468 = vunpack.c.l.b16 %v1377
        %v1469 = vpack.c.b16 %v1438, %v1437
        %v1470 = vpack.c.b16 %v1440, %v1439
        %v1471 = vpack.c.b16 %v1442, %v1441
        %v1472 = vpack.c.b16 %v1444, %v1443
        %v1473 = vpack.c.b16 %v1446, %v1445
        %v1474 = vpack.c.b16 %v1448, %v1447
        %v1475 = vpack.c.b16 %v1450, %v1449
        %v1476 = vpack.c.b16 %v1452, %v1451
        %v1477 = vpack.c.b16 %v1454, %v1453
        %v1478 = vpack.c.b16 %v1456, %v1455
        %v1479 = vpack.c.b16 %v1458, %v1457
        %v1480 = vpack.c.b16 %v1460, %v1459
        %v1481 = vpack.c.b16 %v1462, %v1461
        %v1482 = vpack.c.b16 %v1464, %v1463
        %v1483 = vpack.c.b16 %v1466, %v1465
        %v1484 = vpack.c.b16 %v1468, %v1467
        %1501 = vmatpush.bf16.msra.mxu0 %v1476
        %1502 = vmatpush.bf16.msra.mxu0 %v1475
        %1503 = vmatpush.bf16.msra.mxu0 %v1474
        %1504 = vmatpush.bf16.msra.mxu0 %v1473
        %1505 = vmatpush.bf16.msra.mxu0 %v1472
        %1506 = vmatpush.bf16.msra.mxu0 %v1471
        %1507 = vmatpush.bf16.msra.mxu0 %v1470
        %1508 = vmatpush.bf16.msra.mxu0 %v1469
        %1509 = vmatmul.bf16.gmra.mxu0 %v1397
        %v1510 = vpop.f32.mrf.mxu0
        %v1511 = vadd.f32 0.0, %v1510
        %v1512 = vpop.f32.mrf.mxu0
        %v1513 = vadd.f32 0.0, %v1512
        %1514 = vmatmul.bf16.gmra.mxu0 %v1396
        %v1515 = vpop.f32.mrf.mxu0
        %v1516 = vadd.f32 0.0, %v1515
        %v1517 = vpop.f32.mrf.mxu0
        %1518 = vdwg.mxu0
        %1519 = vmatpush.bf16.msra.mxu0 %v1484
        %1520 = vmatpush.bf16.msra.mxu0 %v1483
        %1521 = vmatpush.bf16.msra.mxu0 %v1482
        %1522 = vmatpush.bf16.msra.mxu0 %v1481
        %1523 = vmatpush.bf16.msra.mxu0 %v1480
        %1524 = vmatpush.bf16.msra.mxu0 %v1479
        %1525 = vmatpush.bf16.msra.mxu0 %v1478
        %1526 = vmatpush.bf16.msra.mxu0 %v1477
        %1527 = vmatmul.bf16.gmra.mxu0 %v1400
        %v1528 = vpop.f32.mrf.mxu0
        %v1529 = vadd.f32 %v1511, %v1528
        %v1530 = vpop.f32.mrf.mxu0
        %v1531 = vadd.f32 %v1513, %v1530
        %1532 = vmatmul.bf16.gmra.mxu0 %v1399
        %v1533 = vpop.f32.mrf.mxu0
        %v1534 = vadd.f32 %v1516, %v1533
        %v1535 = vpop.f32.mrf.mxu0
        %1536 = vdwg.mxu0
        %v1537 = vadd.f32 %v1338, %v1529
        %v1538 = vadd.f32 %v1339, %v1531
        %v1539 = vadd.f32 %v1340, %v1534
        %v1540 = vld [vmem:[%s185 + $0x20] sm:$0x77]
        %s1541 = scalar_lea.vmem [#allocation2], 896
        %v1542 = vld [vmem:[%s1541] sm:$0xf]
        %v1543 = vld [vmem:[%s1541 + $0x4] sm:$0xf]
        %v1544 = vld [vmem:[%s1541 + $0x8] sm:$0xf]
        %v1545 = vld [vmem:[%s1541 + $0xc] sm:$0xf]
        %v1546 = vld [vmem:[%s1541 + $0x10] sm:$0xf]
        %v1547 = vld [vmem:[%s1541 + $0x14] sm:$0xf]
        %v1548 = vld [vmem:[%s1541 + $0x18] sm:$0xf]
        %v1549 = vld [vmem:[%s1541 + $0x1c] sm:$0xf]
        %v1550 = vld [vmem:[%s1541 + $0x20] sm:$0xf]
        %v1551 = vld [vmem:[%s1541 + $0x24] sm:$0xf]
        %v1552 = vld [vmem:[%s1541 + $0x28] sm:$0xf]
        %v1553 = vld [vmem:[%s1541 + $0x2c] sm:$0xf]
        %v1554 = vld [vmem:[%s1541 + $0x30] sm:$0xf]
        %v1555 = vld [vmem:[%s1541 + $0x34] sm:$0xf]
        %v1556 = vld [vmem:[%s1541 + $0x38] sm:$0xf]
        %v1557 = vld [vmem:[%s1541 + $0x3c] sm:$0xf]
        %v1558 = vld [vmem:[%s1541 + $0x40] sm:$0xf]
        %v1559 = vld [vmem:[%s1541 + $0x44] sm:$0xf]
        %v1560 = vld [vmem:[%s1541 + $0x48] sm:$0xf]
        %v1561 = vld [vmem:[%s1541 + $0x4c] sm:$0xf]
        %v1562 = vld [vmem:[%s1541 + $0x50] sm:$0xf]
        %v1563 = vld [vmem:[%s1541 + $0x54] sm:$0xf]
        %v1564 = vld [vmem:[%s1541 + $0x58] sm:$0xf]
        %v1565 = vld [vmem:[%s1541 + $0x5c] sm:$0xf]
        %v1566 = vld [vmem:[%s1541 + $0x60] sm:$0xf]
        %v1567 = vld [vmem:[%s1541 + $0x64] sm:$0xf]
        %v1568 = vld [vmem:[%s1541 + $0x68] sm:$0xf]
        %v1569 = vld [vmem:[%s1541 + $0x6c] sm:$0xf]
        %v1570 = vld [vmem:[%s1541 + $0x70] sm:$0xf]
        %v1571 = vld [vmem:[%s1541 + $0x74] sm:$0xf]
        %v1572 = vld [vmem:[%s1541 + $0x78] sm:$0xf]
        %v1573 = vld [vmem:[%s1541 + $0x7c] sm:$0xf]
        %v1575 = vunpack.c.l.b16 %v1540
        %v1576 = vunpack.c.h.b16 %v1540
        %v1577 = vpack.c.b16 %v1575, %v1386
        %v1578 = vpack.c.b16 %v1576, %v1387
        %vm1579 = vsmask.f32 5376
        %v1581 = vshrl.u32 %v1390, 16
        %v1583 = vrot.slane %v1581, 2
        %v1584 = vshll.u32 %v1390, 16
        %v1586 = vrot.slane %v1584, 3
        %v1587 = vor.u32 %v1583, %v1586
        %v1589 = vshrl.u32 %v1577, 16
        %v1591 = vrot.slane %v1589, 2
        %v1592 = vshll.u32 %v1577, 16
        %v1594 = vrot.slane %v1592, 3
        %v1595 = vor.u32 %v1591, %v1594
        %v1596 = vsel %vm1579, %v1587, %v1595
        %v1598 = vshrl.u32 %v1391, 16
        %v1600 = vrot.slane %v1598, 2
        %v1601 = vshll.u32 %v1391, 16
        %v1603 = vrot.slane %v1601, 3
        %v1604 = vor.u32 %v1600, %v1603
        %v1606 = vshrl.u32 %v1578, 16
        %v1608 = vrot.slane %v1606, 2
        %v1609 = vshll.u32 %v1578, 16
        %v1611 = vrot.slane %v1609, 3
        %v1612 = vor.u32 %v1608, %v1611
        %v1613 = vsel %vm1579, %v1604, %v1612
        %v1650 = vunpack.c.l.b16 %v1542
        %v1651 = vunpack.c.l.b16 %v1543
        %v1652 = vunpack.c.l.b16 %v1544
        %v1653 = vunpack.c.l.b16 %v1545
        %v1654 = vunpack.c.l.b16 %v1546
        %v1655 = vunpack.c.l.b16 %v1547
        %v1656 = vunpack.c.l.b16 %v1548
        %v1657 = vunpack.c.l.b16 %v1549
        %v1658 = vunpack.c.l.b16 %v1550
        %v1659 = vunpack.c.l.b16 %v1551
        %v1660 = vunpack.c.l.b16 %v1552
        %v1661 = vunpack.c.l.b16 %v1553
        %v1662 = vunpack.c.l.b16 %v1554
        %v1663 = vunpack.c.l.b16 %v1555
        %v1664 = vunpack.c.l.b16 %v1556
        %v1665 = vunpack.c.l.b16 %v1557
        %v1666 = vunpack.c.l.b16 %v1558
        %v1667 = vunpack.c.l.b16 %v1559
        %v1668 = vunpack.c.l.b16 %v1560
        %v1669 = vunpack.c.l.b16 %v1561
        %v1670 = vunpack.c.l.b16 %v1562
        %v1671 = vunpack.c.l.b16 %v1563
        %v1672 = vunpack.c.l.b16 %v1564
        %v1673 = vunpack.c.l.b16 %v1565
        %v1674 = vunpack.c.l.b16 %v1566
        %v1675 = vunpack.c.l.b16 %v1567
        %v1676 = vunpack.c.l.b16 %v1568
        %v1677 = vunpack.c.l.b16 %v1569
        %v1678 = vunpack.c.l.b16 %v1570
        %v1679 = vunpack.c.l.b16 %v1571
        %v1680 = vunpack.c.l.b16 %v1572
        %v1681 = vunpack.c.l.b16 %v1573
        %v1682 = vpack.c.b16 %v1651, %v1650
        %v1683 = vpack.c.b16 %v1653, %v1652
        %v1684 = vpack.c.b16 %v1655, %v1654
        %v1685 = vpack.c.b16 %v1657, %v1656
        %v1686 = vpack.c.b16 %v1659, %v1658
        %v1687 = vpack.c.b16 %v1661, %v1660
        %v1688 = vpack.c.b16 %v1663, %v1662
        %v1689 = vpack.c.b16 %v1665, %v1664
        %v1690 = vpack.c.b16 %v1667, %v1666
        %v1691 = vpack.c.b16 %v1669, %v1668
        %v1692 = vpack.c.b16 %v1671, %v1670
        %v1693 = vpack.c.b16 %v1673, %v1672
        %v1694 = vpack.c.b16 %v1675, %v1674
        %v1695 = vpack.c.b16 %v1677, %v1676
        %v1696 = vpack.c.b16 %v1679, %v1678
        %v1697 = vpack.c.b16 %v1681, %v1680
        %1714 = vmatpush.bf16.msra.mxu0 %v1689
        %1715 = vmatpush.bf16.msra.mxu0 %v1688
        %1716 = vmatpush.bf16.msra.mxu0 %v1687
        %1717 = vmatpush.bf16.msra.mxu0 %v1686
        %1718 = vmatpush.bf16.msra.mxu0 %v1685
        %1719 = vmatpush.bf16.msra.mxu0 %v1684
        %1720 = vmatpush.bf16.msra.mxu0 %v1683
        %1721 = vmatpush.bf16.msra.mxu0 %v1682
        %1722 = vmatmul.bf16.gmra.mxu0 %v1596
        %v1723 = vpop.f32.mrf.mxu0
        %v1724 = vadd.f32 0.0, %v1723
        %v1725 = vpop.f32.mrf.mxu0
        %v1726 = vadd.f32 0.0, %v1725
        %1727 = vmatmul.bf16.gmra.mxu0 %v1595
        %v1728 = vpop.f32.mrf.mxu0
        %v1729 = vadd.f32 0.0, %v1728
        %v1730 = vpop.f32.mrf.mxu0
        %1731 = vdwg.mxu0
        %1732 = vmatpush.bf16.msra.mxu0 %v1697
        %1733 = vmatpush.bf16.msra.mxu0 %v1696
        %1734 = vmatpush.bf16.msra.mxu0 %v1695
        %1735 = vmatpush.bf16.msra.mxu0 %v1694
        %1736 = vmatpush.bf16.msra.mxu0 %v1693
        %1737 = vmatpush.bf16.msra.mxu0 %v1692
        %1738 = vmatpush.bf16.msra.mxu0 %v1691
        %1739 = vmatpush.bf16.msra.mxu0 %v1690
        %1740 = vmatmul.bf16.gmra.mxu0 %v1613
        %v1741 = vpop.f32.mrf.mxu0
        %v1742 = vadd.f32 %v1724, %v1741
        %v1743 = vpop.f32.mrf.mxu0
        %v1744 = vadd.f32 %v1726, %v1743
        %1745 = vmatmul.bf16.gmra.mxu0 %v1612
        %v1746 = vpop.f32.mrf.mxu0
        %v1747 = vadd.f32 %v1729, %v1746
        %v1748 = vpop.f32.mrf.mxu0
        %1749 = vdwg.mxu0
        %v1750 = vadd.f32 %v1537, %v1742
        %v1751 = vadd.f32 %v1538, %v1744
        %v1752 = vadd.f32 %v1539, %v1747
        %v1753 = vld [vmem:[%s185 + $0x8] sm:$0x88]
        %s1754 = scalar_lea.vmem [#allocation2], 1024
        %v1755 = vld [vmem:[%s1754] sm:$0xf]
        %v1756 = vld [vmem:[%s1754 + $0x4] sm:$0xf]
        %v1757 = vld [vmem:[%s1754 + $0x8] sm:$0xf]
        %v1758 = vld [vmem:[%s1754 + $0xc] sm:$0xf]
        %v1759 = vld [vmem:[%s1754 + $0x10] sm:$0xf]
        %v1760 = vld [vmem:[%s1754 + $0x14] sm:$0xf]
        %v1761 = vld [vmem:[%s1754 + $0x18] sm:$0xf]
        %v1762 = vld [vmem:[%s1754 + $0x1c] sm:$0xf]
        %v1763 = vld [vmem:[%s1754 + $0x20] sm:$0xf]
        %v1764 = vld [vmem:[%s1754 + $0x24] sm:$0xf]
        %v1765 = vld [vmem:[%s1754 + $0x28] sm:$0xf]
        %v1766 = vld [vmem:[%s1754 + $0x2c] sm:$0xf]
        %v1767 = vld [vmem:[%s1754 + $0x30] sm:$0xf]
        %v1768 = vld [vmem:[%s1754 + $0x34] sm:$0xf]
        %v1769 = vld [vmem:[%s1754 + $0x38] sm:$0xf]
        %v1770 = vld [vmem:[%s1754 + $0x3c] sm:$0xf]
        %v1771 = vld [vmem:[%s1754 + $0x40] sm:$0xf]
        %v1772 = vld [vmem:[%s1754 + $0x44] sm:$0xf]
        %v1773 = vld [vmem:[%s1754 + $0x48] sm:$0xf]
        %v1774 = vld [vmem:[%s1754 + $0x4c] sm:$0xf]
        %v1775 = vld [vmem:[%s1754 + $0x50] sm:$0xf]
        %v1776 = vld [vmem:[%s1754 + $0x54] sm:$0xf]
        %v1777 = vld [vmem:[%s1754 + $0x58] sm:$0xf]
        %v1778 = vld [vmem:[%s1754 + $0x5c] sm:$0xf]
        %v1779 = vld [vmem:[%s1754 + $0x60] sm:$0xf]
        %v1780 = vld [vmem:[%s1754 + $0x64] sm:$0xf]
        %v1781 = vld [vmem:[%s1754 + $0x68] sm:$0xf]
        %v1782 = vld [vmem:[%s1754 + $0x6c] sm:$0xf]
        %v1783 = vld [vmem:[%s1754 + $0x70] sm:$0xf]
        %v1784 = vld [vmem:[%s1754 + $0x74] sm:$0xf]
        %v1785 = vld [vmem:[%s1754 + $0x78] sm:$0xf]
        %v1786 = vld [vmem:[%s1754 + $0x7c] sm:$0xf]
        %v1788 = vunpack.c.l.b16 %v1753
        %v1789 = vunpack.c.h.b16 %v1753
        %v1790 = vpack.c.b16 %v1384, %v1788
        %v1791 = vpack.c.b16 %v1385, %v1789
        %v1792 = vrot.slane %v1790, 3
        %v1793 = vrot.slane %v1577, 3
        %v1794 = vsel %vm806, %v1792, %v1793
        %v1795 = vrot.slane %v1791, 3
        %v1796 = vrot.slane %v1578, 3
        %v1797 = vsel %vm806, %v1795, %v1796
        %v1834 = vunpack.c.l.b16 %v1755
        %v1835 = vunpack.c.l.b16 %v1756
        %v1836 = vunpack.c.l.b16 %v1757
        %v1837 = vunpack.c.l.b16 %v1758
        %v1838 = vunpack.c.l.b16 %v1759
        %v1839 = vunpack.c.l.b16 %v1760
        %v1840 = vunpack.c.l.b16 %v1761
        %v1841 = vunpack.c.l.b16 %v1762
        %v1842 = vunpack.c.l.b16 %v1763
        %v1843 = vunpack.c.l.b16 %v1764
        %v1844 = vunpack.c.l.b16 %v1765
        %v1845 = vunpack.c.l.b16 %v1766
        %v1846 = vunpack.c.l.b16 %v1767
        %v1847 = vunpack.c.l.b16 %v1768
        %v1848 = vunpack.c.l.b16 %v1769
        %v1849 = vunpack.c.l.b16 %v1770
        %v1850 = vunpack.c.l.b16 %v1771
        %v1851 = vunpack.c.l.b16 %v1772
        %v1852 = vunpack.c.l.b16 %v1773
        %v1853 = vunpack.c.l.b16 %v1774
        %v1854 = vunpack.c.l.b16 %v1775
        %v1855 = vunpack.c.l.b16 %v1776
        %v1856 = vunpack.c.l.b16 %v1777
        %v1857 = vunpack.c.l.b16 %v1778
        %v1858 = vunpack.c.l.b16 %v1779
        %v1859 = vunpack.c.l.b16 %v1780
        %v1860 = vunpack.c.l.b16 %v1781
        %v1861 = vunpack.c.l.b16 %v1782
        %v1862 = vunpack.c.l.b16 %v1783
        %v1863 = vunpack.c.l.b16 %v1784
        %v1864 = vunpack.c.l.b16 %v1785
        %v1865 = vunpack.c.l.b16 %v1786
        %v1866 = vpack.c.b16 %v1835, %v1834
        %v1867 = vpack.c.b16 %v1837, %v1836
        %v1868 = vpack.c.b16 %v1839, %v1838
        %v1869 = vpack.c.b16 %v1841, %v1840
        %v1870 = vpack.c.b16 %v1843, %v1842
        %v1871 = vpack.c.b16 %v1845, %v1844
        %v1872 = vpack.c.b16 %v1847, %v1846
        %v1873 = vpack.c.b16 %v1849, %v1848
        %v1874 = vpack.c.b16 %v1851, %v1850
        %v1875 = vpack.c.b16 %v1853, %v1852
        %v1876 = vpack.c.b16 %v1855, %v1854
        %v1877 = vpack.c.b16 %v1857, %v1856
        %v1878 = vpack.c.b16 %v1859, %v1858
        %v1879 = vpack.c.b16 %v1861, %v1860
        %v1880 = vpack.c.b16 %v1863, %v1862
        %v1881 = vpack.c.b16 %v1865, %v1864
        %1898 = vmatpush.bf16.msra.mxu0 %v1873
        %1899 = vmatpush.bf16.msra.mxu0 %v1872
        %1900 = vmatpush.bf16.msra.mxu0 %v1871
        %1901 = vmatpush.bf16.msra.mxu0 %v1870
        %1902 = vmatpush.bf16.msra.mxu0 %v1869
        %1903 = vmatpush.bf16.msra.mxu0 %v1868
        %1904 = vmatpush.bf16.msra.mxu0 %v1867
        %1905 = vmatpush.bf16.msra.mxu0 %v1866
        %1906 = vmatmul.bf16.gmra.mxu0 %v1794
        %v1907 = vpop.f32.mrf.mxu0
        %v1908 = vadd.f32 0.0, %v1907
        %v1909 = vpop.f32.mrf.mxu0
        %v1910 = vadd.f32 0.0, %v1909
        %1911 = vmatmul.bf16.gmra.mxu0 %v1793
        %v1912 = vpop.f32.mrf.mxu0
        %v1913 = vadd.f32 0.0, %v1912
        %v1914 = vpop.f32.mrf.mxu0
        %1915 = vdwg.mxu0
        %1916 = vmatpush.bf16.msra.mxu0 %v1881
        %1917 = vmatpush.bf16.msra.mxu0 %v1880
        %1918 = vmatpush.bf16.msra.mxu0 %v1879
        %1919 = vmatpush.bf16.msra.mxu0 %v1878
        %1920 = vmatpush.bf16.msra.mxu0 %v1877
        %1921 = vmatpush.bf16.msra.mxu0 %v1876
        %1922 = vmatpush.bf16.msra.mxu0 %v1875
        %1923 = vmatpush.bf16.msra.mxu0 %v1874
        %1924 = vmatmul.bf16.gmra.mxu0 %v1797
        %v1925 = vpop.f32.mrf.mxu0
        %v1926 = vadd.f32 %v1908, %v1925
        %v1927 = vpop.f32.mrf.mxu0
        %v1928 = vadd.f32 %v1910, %v1927
        %1929 = vmatmul.bf16.gmra.mxu0 %v1796
        %v1930 = vpop.f32.mrf.mxu0
        %v1931 = vadd.f32 %v1913, %v1930
        %v1932 = vpop.f32.mrf.mxu0
        %1933 = vdwg.mxu0
        %v1934 = vadd.f32 %v1750, %v1926
        %v1935 = vadd.f32 %v1751, %v1928
        %v1936 = vadd.f32 %v1752, %v1931
        %v1937 = vld [vmem:[%s2] sm:$0x1]
        %v1939 = vperm.slane %v1937, 0
        %v1941 = vadd.f32 %v1934, %v1939
        %v1942 = vadd.f32 %v1935, %v1939
        %v1943 = vadd.f32 %v1936, %v1939
        %v1944 = vpack.c.bf16 %v1941, %v1941
        %v1945 = vpack.c.bf16 %v1942, %v1942
        %v1946 = vpack.c.bf16 %v1943, %v1943
        %1947 = vst [vmem:[%s180] sm:$0xf] %v1944
        %1948 = vst [vmem:[%s180 + $0x4] sm:$0xf] %v1945
        %1949 = vst [vmem:[%s180 + $0x8] sm:$0xf] %v1946
        %s1950 = sand.u32 %s94, 1
        %s1951 = scalar_lea.sflag [#allocation4], %s1950
        %s1952 = sand.u32 %s94, 1
        %s1953 = smul.addr %s1952, 12
        %s1954 = scalar_lea.vmem [#allocation5], %s1953
        // Predicated region
        $region37: #{tpu_custom_call.1} parent=31 // pred_check
          %p1955 = pneg %p104
        $region38: #{tpu_custom_call.1} parent=31 // pred_check_branch
          %1957 = sbr.rel (%p1955) target = $region40
        $region39: #{tpu_custom_call.1} parent=31 // pred_region
          %1959 = vsyncadd %s1951, 0
          %s1960 = smul.addr %s18, 3
          %s1961 = smul.addr %s1960, 4
          %s1962 = scalar_lea.hbm %s3, %s1961
          %s1963 = sshll.u32 %s1954, 4
          %s1964 = int_to_ptr.vmem [resolvable:$true] %s1963
          %s1965 = sshll.u32 %s1962, 4
          %s1966 = int_to_ptr.hbm [resolvable:$true] %s1965
          %1971 = dma.vmem_to_hbm [thread:$0]  %s1964, 192, %s1966, %s1951, 64, 64, 4
        $region40: #{tpu_custom_call.1} parent=31 // pred_fallthru
          _
      $region32: #{tpu_custom_call.1} parent=5 // pred_fallthru
        _
      %p1972 = scmp.le.s32.totalorder 2, %s13
      // Predicated region
      $region41: #{tpu_custom_call.1} parent=5 // pred_check
        %p1973 = pneg %p1972
      $region42: #{tpu_custom_call.1} parent=5 // pred_check_branch
        %1975 = sbr.rel (%p1973) target = $region44
      $region43: #{tpu_custom_call.1} parent=5 // pred_region
        %s1976 = ssub.s32 %s13, 2
        // Predicated region
        $region45: #{tpu_custom_call.1} parent=43 // pred_check
          %p1977 = pneg %p110
        $region46: #{tpu_custom_call.1} parent=43 // pred_check_branch
          %1979 = sbr.rel (%p1977) target = $region48
        $region47: #{tpu_custom_call.1} parent=43 // pred_region
          %s1980 = sand.u32 %s95, 1
          %s1981 = scalar_lea.sflag [#allocation4], %s1980
          %s1982 = sand.u32 %s95, 1
          %s1983 = smul.addr %s1982, 12
          %s1984 = scalar_lea.vmem [#allocation5], %s1983
          %1986 = dma.done %s1981, 192
        $region48: #{tpu_custom_call.1} parent=43 // pred_fallthru
          _
      $region44: #{tpu_custom_call.1} parent=5 // pred_fallthru
        _
    $region6: #{tpu_custom_call.1} parent=1 // loop_footer
      %s17 = sadd.s32 1, %s13
    $region7: #{tpu_custom_call.1} parent=1 // loop_footer_branch
      %12 = sbr.rel target = $region3
    $region8: #{tpu_custom_call.1} parent=1 // loop_exit
      _
    %1987 = vsyncpa [#allocation3], 1
    %s1988 = scalar_lea.sflag [#allocation3], 1
    %1989 = vsyncpa %s1988, 1
    %1990 = vsyncpa [#allocation4], 1
    %s1991 = scalar_lea.sflag [#allocation4], 1
    %1992 = vsyncpa %s1991, 1

</llo_original>
